<compile_context>
chip_gen: v7x
topology: tpu7x:2x2x1
jax: 0.10.0
libtpu: 0.0.40
codegen_flags: <defaults>
</compile_context>

<pallas_src>
import functools

import jax
import jax.numpy as jnp
from jax import lax
from jax.experimental import pallas as pl
from jax.experimental.pallas import tpu as pltpu

_MIN_TILE_ROWS = 8


def _round_up(a: int, b: int) -> int:
    return (a + b - 1) // b * b


def _sae_kernel(x_ref, w_enc_ref, w_dec_ref, b_enc_ref, b_pre_ref, out_ref,
                *, k, eps, approx_recip, topk_unroll):
    # ---- LayerNorm in f32 (torch: mean / unbiased std over last dim; eps added to std) ----
    x = x_ref[...].astype(jnp.float32)                        # (tm, d_model)
    d_model = x.shape[-1]
    mu = jnp.mean(x, axis=-1, keepdims=True)
    xc = x - mu
    denom = max(d_model - 1, 1)                               # guard d_model == 1
    var = jnp.sum(xc * xc, axis=-1, keepdims=True) * (1.0 / denom)  # unbiased
    std = jnp.sqrt(var)
    # eps added to std (not inside sqrt) on purpose: mirrors the torch module.
    inv_std = pl.reciprocal(std + eps, approx=approx_recip)   # EUP slot, not a VALU divide
    b_pre_f32 = b_pre_ref[...].astype(jnp.float32)            # hoisted; reused by enc & dec
    xn = xc * inv_std - b_pre_f32                             # (tm, d_model)

    # ---- encoder (MXU, native weight dtype in, f32 accumulation out) ----
    mm_dtype = w_enc_ref.dtype
    pre = jnp.dot(xn.astype(mm_dtype), w_enc_ref[...],
                  preferred_element_type=jnp.float32)
    pre = pre + b_enc_ref[...].astype(jnp.float32)            # (tm, d_hidden)

    # ---- exact per-row top-k threshold: k-1 iterative max extractions ----
    # Extracted maxima are monotone non-increasing, so no running-minimum carry is
    # needed: after k-1 extractions the k-th largest is simply max(work).
    # Ties at the current max are all removed in one step, so heavily-tied inputs can
    # diverge from torch.topk; fine for continuous float activations.
    def body(_, work):
        cur = jnp.max(work, axis=-1, keepdims=True)           # current row max (XLU)
        return jnp.where(work >= cur, -jnp.inf, work)         # remove it (VPU)

    work = lax.fori_loop(0, k - 1, body, pre, unroll=topk_unroll)
    thr = jnp.max(work, axis=-1, keepdims=True)               # k-th largest per row

    # ---- fused ReLU + threshold (single (tm, H) select) ----
    eff_thr = jnp.maximum(thr, 0.0)
    latents = jnp.where(pre >= eff_thr, pre, 0.0)

    # ---- decoder + de-normalization ----
    rec = jnp.dot(latents.astype(mm_dtype), w_dec_ref[...],
                  preferred_element_type=jnp.float32)
    rec = rec + b_pre_f32
    out_ref[...] = (rec * std + mu).astype(out_ref.dtype)


def _vmem_budget_bytes() -> int:
    """Best-effort per-core VMEM budget (leaves headroom for compiler scratch)."""
    cap = 64 * 1024 * 1024                                    # v7x-safe fallback
    try:
        info = pltpu.get_tpu_info()
        cap = int(getattr(info, "vmem_capacity_bytes", cap))
    except Exception:
        pass
    return cap * 3 // 4


def _estimate_vmem_bytes(tm, D, H, x_itemsize, out_itemsize, w_itemsize,
                         weight_buffers) -> int:
    io = 2 * tm * D * x_itemsize + 2 * tm * D * out_itemsize          # double-buffered x/out
    weights = weight_buffers * (2 * D * H + H + D) * w_itemsize       # w_enc + w_dec + biases
    inter = 4 * tm * H * 4 + 6 * tm * D * 4                           # f32 pre/work/latents + LN temps
    return io + weights + inter


def sae_forward(x, w_enc, w_dec, b_enc, b_pre, *, k, eps=1e-5, tile_rows=256,
                approx_reciprocal=False, vmem_budget_bytes=None):
    """Forward pass of the SAE. Returns (recons, auxk, num_dead) like the torch module."""
    B, E, D = x.shape
    H = w_enc.shape[1]
    N = B * E

    budget = _vmem_budget_bytes() if vmem_budget_bytes is None else int(vmem_budget_bytes)
    itemsize = lambda a: jnp.dtype(a.dtype).itemsize

    # Row tiling:
    #  * target `tile_rows` (default 256: full MXU passes on v6e/v7x, amortizes grid step cost)
    #  * keep >= 2 grid steps when N allows so the "parallel" row axis shards across both
    #    TensorCores on v7x (a single-step grid idles one TC)
    #  * shrink until single-buffered weights + (tm,H) f32 intermediates fit the per-core budget
    tm = _round_up(min(tile_rows, _round_up(N, _MIN_TILE_ROWS)), _MIN_TILE_ROWS)
    if N > _MIN_TILE_ROWS:
        tm = min(tm, max(_MIN_TILE_ROWS, _round_up(-(-N // 2), _MIN_TILE_ROWS)))
    while tm > _MIN_TILE_ROWS and _estimate_vmem_bytes(
            tm, D, H, itemsize(x), itemsize(x), itemsize(w_enc), 1) > budget * 9 // 10:
        tm = max(_MIN_TILE_ROWS, _round_up(tm // 2, _MIN_TILE_ROWS))
    n_pad = _round_up(N, tm)

    x2 = x.reshape(N, D)
    if n_pad != N:
        # Padded zero rows are numerically benign (std=0 -> output 0) and sliced off after.
        x2 = jnp.pad(x2, ((0, n_pad - N), (0, 0)))
    b_enc2 = b_enc.reshape(1, H)
    b_pre2 = b_pre.reshape(1, D)

    topk_unroll = True if k <= 16 else 8   # partial unroll keeps XLU/VPU co-issue for large k
    kernel = functools.partial(_sae_kernel, k=k, eps=eps,
                               approx_recip=approx_reciprocal, topk_unroll=topk_unroll)

    bytes_accessed = (x2.size * itemsize(x2) + n_pad * D * itemsize(x)
                      + w_enc.size * itemsize(w_enc) + w_dec.size * itemsize(w_dec)
                      + b_enc.size * itemsize(b_enc) + b_pre.size * itemsize(b_pre))
    cost = pl.CostEstimate(
        flops=4 * n_pad * D * H,              # encoder + decoder matmuls
        transcendentals=2 * n_pad,            # sqrt + reciprocal per row
        bytes_accessed=int(bytes_accessed))

    vmem_need = _estimate_vmem_bytes(tm, D, H, itemsize(x), itemsize(x), itemsize(w_enc), 1)
    vmem_limit = int(min(budget, max(32 * 1024 * 1024, vmem_need + 8 * 1024 * 1024)))

    def build(single_buffer_invariants: bool):
        def inv_spec(shape):
            if single_buffer_invariants:
                # Grid-invariant blocks (constant index_map): single-buffer to halve
                # their VMEM residency; they are DMA'd once and reused every grid step.
                return pl.BlockSpec(shape, lambda i: (0, 0), pipeline_mode=pl.Buffered(1))
            return pl.BlockSpec(shape, lambda i: (0, 0))

        return pl.pallas_call(
            kernel,
            out_shape=jax.ShapeDtypeStruct((n_pad, D), x.dtype),
            grid_spec=pltpu.PrefetchScalarGridSpec(
                num_scalar_prefetch=0,
                grid=(n_pad // tm,),
                in_specs=[
                    pl.BlockSpec((tm, D), lambda i: (i, 0)),   # x rows
                    inv_spec((D, H)),                          # w_enc (grid-invariant)
                    inv_spec((H, D)),                          # w_dec (grid-invariant)
                    inv_spec((1, H)),                          # b_enc
                    inv_spec((1, D)),                          # b_pre
                ],
                out_specs=pl.BlockSpec((tm, D), lambda i: (i, 0)),
            ),
            compiler_params=pltpu.CompilerParams(
                dimension_semantics=("parallel",),            # rows shard across TCs
                vmem_limit_bytes=vmem_limit),
            cost_estimate=cost,
        )

    try:
        recons2 = build(True)(x2, w_enc, w_dec, b_enc2, b_pre2)
        recons2 = jax.block_until_ready(recons2)
    except Exception:
        # Fallback for toolchains where pipeline_mode=pl.Buffered(1) is not accepted.
        recons2 = build(False)(x2, w_enc, w_dec, b_enc2, b_pre2)

    recons = recons2[:N].reshape(B, E, D)

    # stats_last_nonzero buffer starts at zeros -> dead_mask all-False -> auxk path off.
    num_dead = 0
    auxk = None
    return recons, auxk, num_dead


def _reference_forward(x, w_enc, w_dec, b_enc, b_pre, *, k, eps=1e-5):
    """Pure-JAX reference mirroring the PyTorch forward (no dead neurons)."""
    x = x.astype(jnp.float32)
    mu = jnp.mean(x, axis=-1, keepdims=True)
    xc = x - mu
    std = jnp.sqrt(jnp.sum(xc * xc, axis=-1, keepdims=True) / (x.shape[-1] - 1))
    xn = xc / (std + eps) - b_pre.astype(jnp.float32)
    pre = jnp.dot(xn, w_enc.astype(jnp.float32),
                  preferred_element_type=jnp.float32) + b_enc.astype(jnp.float32)
    vals, idx = lax.top_k(pre, k)
    vals = jnp.maximum(vals, 0.0)
    b_idx = jnp.arange(pre.shape[0])[:, None, None]
    e_idx = jnp.arange(pre.shape[1])[None, :, None]
    latents = jnp.zeros_like(pre).at[b_idx, e_idx, idx].set(vals)
    rec = jnp.dot(latents, w_dec.astype(jnp.float32),
                  preferred_element_type=jnp.float32) + b_pre.astype(jnp.float32)
    return rec * std + mu


if __name__ == "__main__":
    # Small deterministic setup; lane-dense last dims (multiples of 128).
    B, E = 2, 8                       # batch, d_embed (sequence)
    D_MODEL, D_HIDDEN = 128, 512
    K = 16

    key = jax.random.PRNGKey(0)
    kx, kw = jax.random.split(key)

    x = jax.random.normal(kx, (B, E, D_MODEL), dtype=jnp.float32)

    # kaiming_uniform_(a=sqrt(5)) equivalent: U(-bound, bound), bound = sqrt(6/((1+a^2)*fan_in))
    fan_in = D_HIDDEN
    bound = (6.0 / ((1.0 + 5.0) * fan_in)) ** 0.5
    w_enc = jax.random.uniform(kw, (D_MODEL, D_HIDDEN), jnp.float32, -bound, bound)
    w_dec = w_enc.T
    w_dec = w_dec / jnp.linalg.norm(w_dec, axis=0, keepdims=True)
    b_enc = jnp.zeros((D_HIDDEN,), jnp.float32)
    b_pre = jnp.zeros((D_MODEL,), jnp.float32)

    # 1) exact path (f32 weights, exact reciprocal) -- strict check vs JAX reference.
    recons, auxk, num_dead = sae_forward(x, w_enc, w_dec, b_enc, b_pre, k=K,
                                         approx_reciprocal=False)
    recons = jax.block_until_ready(recons)
    ref = _reference_forward(x, w_enc, w_dec, b_enc, b_pre, k=K)
    assert recons.shape == (B, E, D_MODEL)
    assert num_dead == 0 and auxk is None
    assert jnp.allclose(recons, ref, atol=2e-4, rtol=2e-4), "mismatch vs JAX reference"

    # 2) performance path smoke test: bf16 weights/activations into the MXU + approx
    #    EUP reciprocal (output dtype follows input dtype -> bf16).
    recons_fast, _, _ = sae_forward(
        x.astype(jnp.bfloat16), w_enc.astype(jnp.bfloat16), w_dec.astype(jnp.bfloat16),
        b_enc.astype(jnp.bfloat16), b_pre.astype(jnp.bfloat16),
        k=K, approx_reciprocal=True)
    recons_fast = jax.block_until_ready(recons_fast)
    assert recons_fast.shape == (B, E, D_MODEL)
    assert bool(jnp.all(jnp.isfinite(recons_fast.astype(jnp.float32))))

    print("KERNEL_OK")
</pallas_src>

<mosaic_0001>
module attributes {stable_mosaic.version = 11 : i64} {
  func.func @_sae_kernel(%arg0: i32, %arg1: memref<8x128xf32, #tpu.memory_space<vmem>>, %arg2: memref<128x512xf32, #tpu.memory_space<vmem>>, %arg3: memref<512x128xf32, #tpu.memory_space<vmem>>, %arg4: memref<1x512xf32, #tpu.memory_space<vmem>>, %arg5: memref<1x128xf32, #tpu.memory_space<vmem>>, %arg6: memref<8x128xf32, #tpu.memory_space<vmem>>) attributes {dimension_semantics = [#tpu.dimension_semantics<parallel>], iteration_bounds = array<i64: 2>, scalar_prefetch = 0 : i64, scratch_operands = 0 : i64, tpu.core_type = #tpu.core_type<tc>, window_params = [{transform_indices = @transform_0, window_bounds = array<i64: 8, 128>}, {pipeline_mode = #tpu.pipeline_mode<synchronous>, transform_indices = @transform_1, window_bounds = array<i64: 128, 512>}, {pipeline_mode = #tpu.pipeline_mode<synchronous>, transform_indices = @transform_2, window_bounds = array<i64: 512, 128>}, {pipeline_mode = #tpu.pipeline_mode<synchronous>, transform_indices = @transform_3, window_bounds = array<i64: 1, 512>}, {pipeline_mode = #tpu.pipeline_mode<synchronous>, transform_indices = @transform_4, window_bounds = array<i64: 1, 128>}, {transform_indices = @transform_5, window_bounds = array<i64: 8, 128>}]} {
    %c0 = arith.constant 0 : index
    %c0_0 = arith.constant 0 : index
    %0 = vector.load %arg1[%c0, %c0_0] : memref<8x128xf32, #tpu.memory_space<vmem>>, vector<8x128xf32>
    %cst = arith.constant dense<0.000000e+00> : vector<8xf32>
    %1 = vector.multi_reduction <add>, %0, %cst [1] : vector<8x128xf32> to vector<8xf32>
    %2 = vector.shape_cast %1 : vector<8xf32> to vector<8x1xf32>
    %cst_1 = arith.constant 1.280000e+02 : f32
    %3 = vector.broadcast %cst_1 : f32 to vector<8x1xf32>
    %4 = arith.divf %2, %3 : vector<8x1xf32>
    %5 = vector.broadcast %4 : vector<8x1xf32> to vector<8x128xf32>
    %6 = arith.subf %0, %5 : vector<8x128xf32>
    %7 = arith.mulf %6, %6 : vector<8x128xf32>
    %cst_2 = arith.constant dense<0.000000e+00> : vector<8xf32>
    %8 = vector.multi_reduction <add>, %7, %cst_2 [1] : vector<8x128xf32> to vector<8xf32>
    %9 = vector.shape_cast %8 : vector<8xf32> to vector<8x1xf32>
    %cst_3 = arith.constant 0.00787401571 : f32
    %10 = vector.broadcast %cst_3 : f32 to vector<8x1xf32>
    %11 = arith.mulf %9, %10 : vector<8x1xf32>
    %12 = math.sqrt %11 : vector<8x1xf32>
    %cst_4 = arith.constant 9.99999974E-6 : f32
    %13 = vector.broadcast %cst_4 : f32 to vector<8x1xf32>
    %14 = arith.addf %12, %13 : vector<8x1xf32>
    %15 = tpu.reciprocal %14 : vector<8x1xf32> -> vector<8x1xf32>
    %c0_5 = arith.constant 0 : index
    %c0_6 = arith.constant 0 : index
    %16 = vector.load %arg5[%c0_5, %c0_6] : memref<1x128xf32, #tpu.memory_space<vmem>>, vector<1x128xf32>
    %17 = vector.broadcast %15 : vector<8x1xf32> to vector<8x128xf32>
    %18 = arith.mulf %6, %17 : vector<8x128xf32>
    %19 = vector.broadcast %16 : vector<1x128xf32> to vector<8x128xf32>
    %20 = arith.subf %18, %19 : vector<8x128xf32>
    %c0_7 = arith.constant 0 : index
    %c0_8 = arith.constant 0 : index
    %21 = vector.load %arg2[%c0_7, %c0_8] : memref<128x512xf32, #tpu.memory_space<vmem>>, vector<128x512xf32>
    %cst_9 = arith.constant dense<0.000000e+00> : vector<8x512xf32>
    %22 = tpu.matmul %20, %21, %cst_9 {dimension_numbers = #tpu.dot_dimension_numbers<[1], [0], [0], [1], [0, 0, 1, 1], [], []>} : vector<8x128xf32>, vector<128x512xf32>, vector<8x512xf32> -> vector<8x512xf32>
    %c0_10 = arith.constant 0 : index
    %c0_11 = arith.constant 0 : index
    %23 = vector.load %arg4[%c0_10, %c0_11] : memref<1x512xf32, #tpu.memory_space<vmem>>, vector<1x512xf32>
    %24 = vector.broadcast %23 : vector<1x512xf32> to vector<8x512xf32>
    %25 = arith.addf %22, %24 : vector<8x512xf32>
    %c0_i32 = arith.constant 0 : i32
    %cst_12 = arith.constant dense<0xFF800000> : vector<8xf32>
    %26 = vector.multi_reduction <maximumf>, %25, %cst_12 [1] : vector<8x512xf32> to vector<8xf32>
    %27 = vector.shape_cast %26 : vector<8xf32> to vector<8x1xf32>
    %28 = vector.broadcast %27 : vector<8x1xf32> to vector<8x512xf32>
    %29 = arith.cmpf oge, %25, %28 : vector<8x512xf32>
    %cst_13 = arith.constant 0xFF800000 : f32
    %30 = vector.broadcast %cst_13 : f32 to vector<8x512xf32>
    %31 = arith.select %29, %30, %25 : vector<8x512xi1>, vector<8x512xf32>
    %c1_i32 = arith.constant 1 : i32
    %cst_14 = arith.constant dense<0xFF800000> : vector<8xf32>
    %32 = vector.multi_reduction <maximumf>, %31, %cst_14 [1] : vector<8x512xf32> to vector<8xf32>
    %33 = vector.shape_cast %32 : vector<8xf32> to vector<8x1xf32>
    %34 = vector.broadcast %33 : vector<8x1xf32> to vector<8x512xf32>
    %35 = arith.cmpf oge, %31, %34 : vector<8x512xf32>
    %cst_15 = arith.constant 0xFF800000 : f32
    %36 = vector.broadcast %cst_15 : f32 to vector<8x512xf32>
    %37 = arith.select %35, %36, %31 : vector<8x512xi1>, vector<8x512xf32>
    %c2_i32 = arith.constant 2 : i32
    %cst_16 = arith.constant dense<0xFF800000> : vector<8xf32>
    %38 = vector.multi_reduction <maximumf>, %37, %cst_16 [1] : vector<8x512xf32> to vector<8xf32>
    %39 = vector.shape_cast %38 : vector<8xf32> to vector<8x1xf32>
    %40 = vector.broadcast %39 : vector<8x1xf32> to vector<8x512xf32>
    %41 = arith.cmpf oge, %37, %40 : vector<8x512xf32>
    %cst_17 = arith.constant 0xFF800000 : f32
    %42 = vector.broadcast %cst_17 : f32 to vector<8x512xf32>
    %43 = arith.select %41, %42, %37 : vector<8x512xi1>, vector<8x512xf32>
    %c3_i32 = arith.constant 3 : i32
    %cst_18 = arith.constant dense<0xFF800000> : vector<8xf32>
    %44 = vector.multi_reduction <maximumf>, %43, %cst_18 [1] : vector<8x512xf32> to vector<8xf32>
    %45 = vector.shape_cast %44 : vector<8xf32> to vector<8x1xf32>
    %46 = vector.broadcast %45 : vector<8x1xf32> to vector<8x512xf32>
    %47 = arith.cmpf oge, %43, %46 : vector<8x512xf32>
    %cst_19 = arith.constant 0xFF800000 : f32
    %48 = vector.broadcast %cst_19 : f32 to vector<8x512xf32>
    %49 = arith.select %47, %48, %43 : vector<8x512xi1>, vector<8x512xf32>
    %c4_i32 = arith.constant 4 : i32
    %cst_20 = arith.constant dense<0xFF800000> : vector<8xf32>
    %50 = vector.multi_reduction <maximumf>, %49, %cst_20 [1] : vector<8x512xf32> to vector<8xf32>
    %51 = vector.shape_cast %50 : vector<8xf32> to vector<8x1xf32>
    %52 = vector.broadcast %51 : vector<8x1xf32> to vector<8x512xf32>
    %53 = arith.cmpf oge, %49, %52 : vector<8x512xf32>
    %cst_21 = arith.constant 0xFF800000 : f32
    %54 = vector.broadcast %cst_21 : f32 to vector<8x512xf32>
    %55 = arith.select %53, %54, %49 : vector<8x512xi1>, vector<8x512xf32>
    %c5_i32 = arith.constant 5 : i32
    %cst_22 = arith.constant dense<0xFF800000> : vector<8xf32>
    %56 = vector.multi_reduction <maximumf>, %55, %cst_22 [1] : vector<8x512xf32> to vector<8xf32>
    %57 = vector.shape_cast %56 : vector<8xf32> to vector<8x1xf32>
    %58 = vector.broadcast %57 : vector<8x1xf32> to vector<8x512xf32>
    %59 = arith.cmpf oge, %55, %58 : vector<8x512xf32>
    %cst_23 = arith.constant 0xFF800000 : f32
    %60 = vector.broadcast %cst_23 : f32 to vector<8x512xf32>
    %61 = arith.select %59, %60, %55 : vector<8x512xi1>, vector<8x512xf32>
    %c6_i32 = arith.constant 6 : i32
    %cst_24 = arith.constant dense<0xFF800000> : vector<8xf32>
    %62 = vector.multi_reduction <maximumf>, %61, %cst_24 [1] : vector<8x512xf32> to vector<8xf32>
    %63 = vector.shape_cast %62 : vector<8xf32> to vector<8x1xf32>
    %64 = vector.broadcast %63 : vector<8x1xf32> to vector<8x512xf32>
    %65 = arith.cmpf oge, %61, %64 : vector<8x512xf32>
    %cst_25 = arith.constant 0xFF800000 : f32
    %66 = vector.broadcast %cst_25 : f32 to vector<8x512xf32>
    %67 = arith.select %65, %66, %61 : vector<8x512xi1>, vector<8x512xf32>
    %c7_i32 = arith.constant 7 : i32
    %cst_26 = arith.constant dense<0xFF800000> : vector<8xf32>
    %68 = vector.multi_reduction <maximumf>, %67, %cst_26 [1] : vector<8x512xf32> to vector<8xf32>
    %69 = vector.shape_cast %68 : vector<8xf32> to vector<8x1xf32>
    %70 = vector.broadcast %69 : vector<8x1xf32> to vector<8x512xf32>
    %71 = arith.cmpf oge, %67, %70 : vector<8x512xf32>
    %cst_27 = arith.constant 0xFF800000 : f32
    %72 = vector.broadcast %cst_27 : f32 to vector<8x512xf32>
    %73 = arith.select %71, %72, %67 : vector<8x512xi1>, vector<8x512xf32>
    %c8_i32 = arith.constant 8 : i32
    %cst_28 = arith.constant dense<0xFF800000> : vector<8xf32>
    %74 = vector.multi_reduction <maximumf>, %73, %cst_28 [1] : vector<8x512xf32> to vector<8xf32>
    %75 = vector.shape_cast %74 : vector<8xf32> to vector<8x1xf32>
    %76 = vector.broadcast %75 : vector<8x1xf32> to vector<8x512xf32>
    %77 = arith.cmpf oge, %73, %76 : vector<8x512xf32>
    %cst_29 = arith.constant 0xFF800000 : f32
    %78 = vector.broadcast %cst_29 : f32 to vector<8x512xf32>
    %79 = arith.select %77, %78, %73 : vector<8x512xi1>, vector<8x512xf32>
    %c9_i32 = arith.constant 9 : i32
    %cst_30 = arith.constant dense<0xFF800000> : vector<8xf32>
    %80 = vector.multi_reduction <maximumf>, %79, %cst_30 [1] : vector<8x512xf32> to vector<8xf32>
    %81 = vector.shape_cast %80 : vector<8xf32> to vector<8x1xf32>
    %82 = vector.broadcast %81 : vector<8x1xf32> to vector<8x512xf32>
    %83 = arith.cmpf oge, %79, %82 : vector<8x512xf32>
    %cst_31 = arith.constant 0xFF800000 : f32
    %84 = vector.broadcast %cst_31 : f32 to vector<8x512xf32>
    %85 = arith.select %83, %84, %79 : vector<8x512xi1>, vector<8x512xf32>
    %c10_i32 = arith.constant 10 : i32
    %cst_32 = arith.constant dense<0xFF800000> : vector<8xf32>
    %86 = vector.multi_reduction <maximumf>, %85, %cst_32 [1] : vector<8x512xf32> to vector<8xf32>
    %87 = vector.shape_cast %86 : vector<8xf32> to vector<8x1xf32>
    %88 = vector.broadcast %87 : vector<8x1xf32> to vector<8x512xf32>
    %89 = arith.cmpf oge, %85, %88 : vector<8x512xf32>
    %cst_33 = arith.constant 0xFF800000 : f32
    %90 = vector.broadcast %cst_33 : f32 to vector<8x512xf32>
    %91 = arith.select %89, %90, %85 : vector<8x512xi1>, vector<8x512xf32>
    %c11_i32 = arith.constant 11 : i32
    %cst_34 = arith.constant dense<0xFF800000> : vector<8xf32>
    %92 = vector.multi_reduction <maximumf>, %91, %cst_34 [1] : vector<8x512xf32> to vector<8xf32>
    %93 = vector.shape_cast %92 : vector<8xf32> to vector<8x1xf32>
    %94 = vector.broadcast %93 : vector<8x1xf32> to vector<8x512xf32>
    %95 = arith.cmpf oge, %91, %94 : vector<8x512xf32>
    %cst_35 = arith.constant 0xFF800000 : f32
    %96 = vector.broadcast %cst_35 : f32 to vector<8x512xf32>
    %97 = arith.select %95, %96, %91 : vector<8x512xi1>, vector<8x512xf32>
    %c12_i32 = arith.constant 12 : i32
    %cst_36 = arith.constant dense<0xFF800000> : vector<8xf32>
    %98 = vector.multi_reduction <maximumf>, %97, %cst_36 [1] : vector<8x512xf32> to vector<8xf32>
    %99 = vector.shape_cast %98 : vector<8xf32> to vector<8x1xf32>
    %100 = vector.broadcast %99 : vector<8x1xf32> to vector<8x512xf32>
    %101 = arith.cmpf oge, %97, %100 : vector<8x512xf32>
    %cst_37 = arith.constant 0xFF800000 : f32
    %102 = vector.broadcast %cst_37 : f32 to vector<8x512xf32>
    %103 = arith.select %101, %102, %97 : vector<8x512xi1>, vector<8x512xf32>
    %c13_i32 = arith.constant 13 : i32
    %cst_38 = arith.constant dense<0xFF800000> : vector<8xf32>
    %104 = vector.multi_reduction <maximumf>, %103, %cst_38 [1] : vector<8x512xf32> to vector<8xf32>
    %105 = vector.shape_cast %104 : vector<8xf32> to vector<8x1xf32>
    %106 = vector.broadcast %105 : vector<8x1xf32> to vector<8x512xf32>
    %107 = arith.cmpf oge, %103, %106 : vector<8x512xf32>
    %cst_39 = arith.constant 0xFF800000 : f32
    %108 = vector.broadcast %cst_39 : f32 to vector<8x512xf32>
    %109 = arith.select %107, %108, %103 : vector<8x512xi1>, vector<8x512xf32>
    %c14_i32 = arith.constant 14 : i32
    %cst_40 = arith.constant dense<0xFF800000> : vector<8xf32>
    %110 = vector.multi_reduction <maximumf>, %109, %cst_40 [1] : vector<8x512xf32> to vector<8xf32>
    %111 = vector.shape_cast %110 : vector<8xf32> to vector<8x1xf32>
    %112 = vector.broadcast %111 : vector<8x1xf32> to vector<8x512xf32>
    %113 = arith.cmpf oge, %109, %112 : vector<8x512xf32>
    %cst_41 = arith.constant 0xFF800000 : f32
    %114 = vector.broadcast %cst_41 : f32 to vector<8x512xf32>
    %115 = arith.select %113, %114, %109 : vector<8x512xi1>, vector<8x512xf32>
    %cst_42 = arith.constant dense<0xFF800000> : vector<8xf32>
    %116 = vector.multi_reduction <maximumf>, %115, %cst_42 [1] : vector<8x512xf32> to vector<8xf32>
    %117 = vector.shape_cast %116 : vector<8xf32> to vector<8x1xf32>
    %cst_43 = arith.constant 0.000000e+00 : f32
    %118 = vector.broadcast %cst_43 : f32 to vector<8x1xf32>
    %119 = arith.maximumf %117, %118 : vector<8x1xf32>
    %120 = vector.broadcast %119 : vector<8x1xf32> to vector<8x512xf32>
    %121 = arith.cmpf oge, %25, %120 : vector<8x512xf32>
    %cst_44 = arith.constant 0.000000e+00 : f32
    %122 = vector.broadcast %cst_44 : f32 to vector<8x512xf32>
    %123 = arith.select %121, %25, %122 : vector<8x512xi1>, vector<8x512xf32>
    %c0_45 = arith.constant 0 : index
    %c0_46 = arith.constant 0 : index
    %124 = vector.load %arg3[%c0_45, %c0_46] : memref<512x128xf32, #tpu.memory_space<vmem>>, vector<512x128xf32>
    %cst_47 = arith.constant dense<0.000000e+00> : vector<8x128xf32>
    %125 = tpu.matmul %123, %124, %cst_47 {dimension_numbers = #tpu.dot_dimension_numbers<[1], [0], [0], [1], [0, 0, 1, 1], [], []>} : vector<8x512xf32>, vector<512x128xf32>, vector<8x128xf32> -> vector<8x128xf32>
    %126 = vector.broadcast %16 : vector<1x128xf32> to vector<8x128xf32>
    %127 = arith.addf %125, %126 : vector<8x128xf32>
    %128 = vector.broadcast %12 : vector<8x1xf32> to vector<8x128xf32>
    %129 = arith.mulf %127, %128 : vector<8x128xf32>
    %130 = vector.broadcast %4 : vector<8x1xf32> to vector<8x128xf32>
    %131 = arith.addf %129, %130 : vector<8x128xf32>
    %c0_48 = arith.constant 0 : index
    %c0_49 = arith.constant 0 : index
    %132 = vector.load %arg6[%c0_48, %c0_49] : memref<8x128xf32, #tpu.memory_space<vmem>>, vector<8x128xf32>
    tpu.vector_store %arg6[%c0_48, %c0_49], %131 {strides = array<i32>} : memref<8x128xf32, #tpu.memory_space<vmem>>, vector<8x128xf32>,
    return
  }
  func.func @transform_0(%arg0: i32) -> (i32, i32) {
    %c0_i32 = arith.constant 0 : i32
    %c0_i32_0 = arith.constant 0 : i32
    return %arg0, %c0_i32 : i32, i32
  }
  func.func @transform_1(%arg0: i32) -> (i32, i32) {
    %c0_i32 = arith.constant 0 : i32
    %c0_i32_0 = arith.constant 0 : i32
    %c0_i32_1 = arith.constant 0 : i32
    return %c0_i32, %c0_i32_0 : i32, i32
  }
  func.func @transform_2(%arg0: i32) -> (i32, i32) {
    %c0_i32 = arith.constant 0 : i32
    %c0_i32_0 = arith.constant 0 : i32
    %c0_i32_1 = arith.constant 0 : i32
    return %c0_i32, %c0_i32_0 : i32, i32
  }
  func.func @transform_3(%arg0: i32) -> (i32, i32) {
    %c0_i32 = arith.constant 0 : i32
    %c0_i32_0 = arith.constant 0 : i32
    %c0_i32_1 = arith.constant 0 : i32
    return %c0_i32, %c0_i32_0 : i32, i32
  }
  func.func @transform_4(%arg0: i32) -> (i32, i32) {
    %c0_i32 = arith.constant 0 : i32
    %c0_i32_0 = arith.constant 0 : i32
    %c0_i32_1 = arith.constant 0 : i32
    return %c0_i32, %c0_i32_0 : i32, i32
  }
  func.func @transform_5(%arg0: i32) -> (i32, i32) {
    %c0_i32 = arith.constant 0 : i32
    %c0_i32_0 = arith.constant 0 : i32
    return %arg0, %c0_i32 : i32, i32
  }
}

module attributes {stable_mosaic.version = 11 : i64} {
  func.func @_sae_kernel(%arg0: i32, %arg1: memref<8x128xf32, #tpu.memory_space<vmem>>, %arg2: memref<128x512xf32, #tpu.memory_space<vmem>>, %arg3: memref<512x128xf32, #tpu.memory_space<vmem>>, %arg4: memref<1x512xf32, #tpu.memory_space<vmem>>, %arg5: memref<1x128xf32, #tpu.memory_space<vmem>>, %arg6: memref<8x128xf32, #tpu.memory_space<vmem>>) attributes {dimension_semantics = [#tpu.dimension_semantics<parallel>], iteration_bounds = array<i64: 2>, scalar_prefetch = 0 : i64, scratch_operands = 0 : i64, tpu.core_type = #tpu.core_type<tc>, window_params = [{transform_indices = @transform_0, window_bounds = array<i64: 8, 128>}, {pipeline_mode = #tpu.pipeline_mode<synchronous>, transform_indices = @transform_1, window_bounds = array<i64: 128, 512>}, {pipeline_mode = #tpu.pipeline_mode<synchronous>, transform_indices = @transform_2, window_bounds = array<i64: 512, 128>}, {pipeline_mode = #tpu.pipeline_mode<synchronous>, transform_indices = @transform_3, window_bounds = array<i64: 1, 512>}, {pipeline_mode = #tpu.pipeline_mode<synchronous>, transform_indices = @transform_4, window_bounds = array<i64: 1, 128>}, {transform_indices = @transform_5, window_bounds = array<i64: 8, 128>}]} {
    %c0 = arith.constant 0 : index
    %c0_0 = arith.constant 0 : index
    %0 = vector.load %arg1[%c0, %c0_0] : memref<8x128xf32, #tpu.memory_space<vmem>>, vector<8x128xf32>
    %cst = arith.constant dense<0.000000e+00> : vector<8xf32>
    %1 = vector.multi_reduction <add>, %0, %cst [1] : vector<8x128xf32> to vector<8xf32>
    %2 = vector.shape_cast %1 : vector<8xf32> to vector<8x1xf32>
    %cst_1 = arith.constant 1.280000e+02 : f32
    %3 = vector.broadcast %cst_1 : f32 to vector<8x1xf32>
    %4 = arith.divf %2, %3 : vector<8x1xf32>
    %5 = vector.broadcast %4 : vector<8x1xf32> to vector<8x128xf32>
    %6 = arith.subf %0, %5 : vector<8x128xf32>
    %7 = arith.mulf %6, %6 : vector<8x128xf32>
    %cst_2 = arith.constant dense<0.000000e+00> : vector<8xf32>
    %8 = vector.multi_reduction <add>, %7, %cst_2 [1] : vector<8x128xf32> to vector<8xf32>
    %9 = vector.shape_cast %8 : vector<8xf32> to vector<8x1xf32>
    %cst_3 = arith.constant 0.00787401571 : f32
    %10 = vector.broadcast %cst_3 : f32 to vector<8x1xf32>
    %11 = arith.mulf %9, %10 : vector<8x1xf32>
    %12 = math.sqrt %11 : vector<8x1xf32>
    %cst_4 = arith.constant 9.99999974E-6 : f32
    %13 = vector.broadcast %cst_4 : f32 to vector<8x1xf32>
    %14 = arith.addf %12, %13 : vector<8x1xf32>
    %15 = tpu.reciprocal %14 : vector<8x1xf32> -> vector<8x1xf32>
    %c0_5 = arith.constant 0 : index
    %c0_6 = arith.constant 0 : index
    %16 = vector.load %arg5[%c0_5, %c0_6] : memref<1x128xf32, #tpu.memory_space<vmem>>, vector<1x128xf32>
    %17 = vector.broadcast %15 : vector<8x1xf32> to vector<8x128xf32>
    %18 = arith.mulf %6, %17 : vector<8x128xf32>
    %19 = vector.broadcast %16 : vector<1x128xf32> to vector<8x128xf32>
    %20 = arith.subf %18, %19 : vector<8x128xf32>
    %c0_7 = arith.constant 0 : index
    %c0_8 = arith.constant 0 : index
    %21 = vector.load %arg2[%c0_7, %c0_8] : memref<128x512xf32, #tpu.memory_space<vmem>>, vector<128x512xf32>
    %cst_9 = arith.constant dense<0.000000e+00> : vector<8x512xf32>
    %22 = tpu.matmul %20, %21, %cst_9 {dimension_numbers = #tpu.dot_dimension_numbers<[1], [0], [0], [1], [0, 0, 1, 1], [], []>} : vector<8x128xf32>, vector<128x512xf32>, vector<8x512xf32> -> vector<8x512xf32>
    %c0_10 = arith.constant 0 : index
    %c0_11 = arith.constant 0 : index
    %23 = vector.load %arg4[%c0_10, %c0_11] : memref<1x512xf32, #tpu.memory_space<vmem>>, vector<1x512xf32>
    %24 = vector.broadcast %23 : vector<1x512xf32> to vector<8x512xf32>
    %25 = arith.addf %22, %24 : vector<8x512xf32>
    %c0_i32 = arith.constant 0 : i32
    %cst_12 = arith.constant dense<0xFF800000> : vector<8xf32>
    %26 = vector.multi_reduction <maximumf>, %25, %cst_12 [1] : vector<8x512xf32> to vector<8xf32>
    %27 = vector.shape_cast %26 : vector<8xf32> to vector<8x1xf32>
    %28 = vector.broadcast %27 : vector<8x1xf32> to vector<8x512xf32>
    %29 = arith.cmpf oge, %25, %28 : vector<8x512xf32>
    %cst_13 = arith.constant 0xFF800000 : f32
    %30 = vector.broadcast %cst_13 : f32 to vector<8x512xf32>
    %31 = arith.select %29, %30, %25 : vector<8x512xi1>, vector<8x512xf32>
    %c1_i32 = arith.constant 1 : i32
    %cst_14 = arith.constant dense<0xFF800000> : vector<8xf32>
    %32 = vector.multi_reduction <maximumf>, %31, %cst_14 [1] : vector<8x512xf32> to vector<8xf32>
    %33 = vector.shape_cast %32 : vector<8xf32> to vector<8x1xf32>
    %34 = vector.broadcast %33 : vector<8x1xf32> to vector<8x512xf32>
    %35 = arith.cmpf oge, %31, %34 : vector<8x512xf32>
    %cst_15 = arith.constant 0xFF800000 : f32
    %36 = vector.broadcast %cst_15 : f32 to vector<8x512xf32>
    %37 = arith.select %35, %36, %31 : vector<8x512xi1>, vector<8x512xf32>
    %c2_i32 = arith.constant 2 : i32
    %cst_16 = arith.constant dense<0xFF800000> : vector<8xf32>
    %38 = vector.multi_reduction <maximumf>, %37, %cst_16 [1] : vector<8x512xf32> to vector<8xf32>
    %39 = vector.shape_cast %38 : vector<8xf32> to vector<8x1xf32>
    %40 = vector.broadcast %39 : vector<8x1xf32> to vector<8x512xf32>
    %41 = arith.cmpf oge, %37, %40 : vector<8x512xf32>
    %cst_17 = arith.constant 0xFF800000 : f32
    %42 = vector.broadcast %cst_17 : f32 to vector<8x512xf32>
    %43 = arith.select %41, %42, %37 : vector<8x512xi1>, vector<8x512xf32>
    %c3_i32 = arith.constant 3 : i32
    %cst_18 = arith.constant dense<0xFF800000> : vector<8xf32>
    %44 = vector.multi_reduction <maximumf>, %43, %cst_18 [1] : vector<8x512xf32> to vector<8xf32>
    %45 = vector.shape_cast %44 : vector<8xf32> to vector<8x1xf32>
    %46 = vector.broadcast %45 : vector<8x1xf32> to vector<8x512xf32>
    %47 = arith.cmpf oge, %43, %46 : vector<8x512xf32>
    %cst_19 = arith.constant 0xFF800000 : f32
    %48 = vector.broadcast %cst_19 : f32 to vector<8x512xf32>
    %49 = arith.select %47, %48, %43 : vector<8x512xi1>, vector<8x512xf32>
    %c4_i32 = arith.constant 4 : i32
    %cst_20 = arith.constant dense<0xFF800000> : vector<8xf32>
    %50 = vector.multi_reduction <maximumf>, %49, %cst_20 [1] : vector<8x512xf32> to vector<8xf32>
    %51 = vector.shape_cast %50 : vector<8xf32> to vector<8x1xf32>
    %52 = vector.broadcast %51 : vector<8x1xf32> to vector<8x512xf32>
    %53 = arith.cmpf oge, %49, %52 : vector<8x512xf32>
    %cst_21 = arith.constant 0xFF800000 : f32
    %54 = vector.broadcast %cst_21 : f32 to vector<8x512xf32>
    %55 = arith.select %53, %54, %49 : vector<8x512xi1>, vector<8x512xf32>
    %c5_i32 = arith.constant 5 : i32
    %cst_22 = arith.constant dense<0xFF800000> : vector<8xf32>
    %56 = vector.multi_reduction <maximumf>, %55, %cst_22 [1] : vector<8x512xf32> to vector<8xf32>
    %57 = vector.shape_cast %56 : vector<8xf32> to vector<8x1xf32>
    %58 = vector.broadcast %57 : vector<8x1xf32> to vector<8x512xf32>
    %59 = arith.cmpf oge, %55, %58 : vector<8x512xf32>
    %cst_23 = arith.constant 0xFF800000 : f32
    %60 = vector.broadcast %cst_23 : f32 to vector<8x512xf32>
    %61 = arith.select %59, %60, %55 : vector<8x512xi1>, vector<8x512xf32>
    %c6_i32 = arith.constant 6 : i32
    %cst_24 = arith.constant dense<0xFF800000> : vector<8xf32>
    %62 = vector.multi_reduction <maximumf>, %61, %cst_24 [1] : vector<8x512xf32> to vector<8xf32>
    %63 = vector.shape_cast %62 : vector<8xf32> to vector<8x1xf32>
    %64 = vector.broadcast %63 : vector<8x1xf32> to vector<8x512xf32>
    %65 = arith.cmpf oge, %61, %64 : vector<8x512xf32>
    %cst_25 = arith.constant 0xFF800000 : f32
    %66 = vector.broadcast %cst_25 : f32 to vector<8x512xf32>
    %67 = arith.select %65, %66, %61 : vector<8x512xi1>, vector<8x512xf32>
    %c7_i32 = arith.constant 7 : i32
    %cst_26 = arith.constant dense<0xFF800000> : vector<8xf32>
    %68 = vector.multi_reduction <maximumf>, %67, %cst_26 [1] : vector<8x512xf32> to vector<8xf32>
    %69 = vector.shape_cast %68 : vector<8xf32> to vector<8x1xf32>
    %70 = vector.broadcast %69 : vector<8x1xf32> to vector<8x512xf32>
    %71 = arith.cmpf oge, %67, %70 : vector<8x512xf32>
    %cst_27 = arith.constant 0xFF800000 : f32
    %72 = vector.broadcast %cst_27 : f32 to vector<8x512xf32>
    %73 = arith.select %71, %72, %67 : vector<8x512xi1>, vector<8x512xf32>
    %c8_i32 = arith.constant 8 : i32
    %cst_28 = arith.constant dense<0xFF800000> : vector<8xf32>
    %74 = vector.multi_reduction <maximumf>, %73, %cst_28 [1] : vector<8x512xf32> to vector<8xf32>
    %75 = vector.shape_cast %74 : vector<8xf32> to vector<8x1xf32>
    %76 = vector.broadcast %75 : vector<8x1xf32> to vector<8x512xf32>
    %77 = arith.cmpf oge, %73, %76 : vector<8x512xf32>
    %cst_29 = arith.constant 0xFF800000 : f32
    %78 = vector.broadcast %cst_29 : f32 to vector<8x512xf32>
    %79 = arith.select %77, %78, %73 : vector<8x512xi1>, vector<8x512xf32>
    %c9_i32 = arith.constant 9 : i32
    %cst_30 = arith.constant dense<0xFF800000> : vector<8xf32>
    %80 = vector.multi_reduction <maximumf>, %79, %cst_30 [1] : vector<8x512xf32> to vector<8xf32>
    %81 = vector.shape_cast %80 : vector<8xf32> to vector<8x1xf32>
    %82 = vector.broadcast %81 : vector<8x1xf32> to vector<8x512xf32>
    %83 = arith.cmpf oge, %79, %82 : vector<8x512xf32>
    %cst_31 = arith.constant 0xFF800000 : f32
    %84 = vector.broadcast %cst_31 : f32 to vector<8x512xf32>
    %85 = arith.select %83, %84, %79 : vector<8x512xi1>, vector<8x512xf32>
    %c10_i32 = arith.constant 10 : i32
    %cst_32 = arith.constant dense<0xFF800000> : vector<8xf32>
    %86 = vector.multi_reduction <maximumf>, %85, %cst_32 [1] : vector<8x512xf32> to vector<8xf32>
    %87 = vector.shape_cast %86 : vector<8xf32> to vector<8x1xf32>
    %88 = vector.broadcast %87 : vector<8x1xf32> to vector<8x512xf32>
    %89 = arith.cmpf oge, %85, %88 : vector<8x512xf32>
    %cst_33 = arith.constant 0xFF800000 : f32
    %90 = vector.broadcast %cst_33 : f32 to vector<8x512xf32>
    %91 = arith.select %89, %90, %85 : vector<8x512xi1>, vector<8x512xf32>
    %c11_i32 = arith.constant 11 : i32
    %cst_34 = arith.constant dense<0xFF800000> : vector<8xf32>
    %92 = vector.multi_reduction <maximumf>, %91, %cst_34 [1] : vector<8x512xf32> to vector<8xf32>
    %93 = vector.shape_cast %92 : vector<8xf32> to vector<8x1xf32>
    %94 = vector.broadcast %93 : vector<8x1xf32> to vector<8x512xf32>
    %95 = arith.cmpf oge, %91, %94 : vector<8x512xf32>
    %cst_35 = arith.constant 0xFF800000 : f32
    %96 = vector.broadcast %cst_35 : f32 to vector<8x512xf32>
    %97 = arith.select %95, %96, %91 : vector<8x512xi1>, vector<8x512xf32>
    %c12_i32 = arith.constant 12 : i32
    %cst_36 = arith.constant dense<0xFF800000> : vector<8xf32>
    %98 = vector.multi_reduction <maximumf>, %97, %cst_36 [1] : vector<8x512xf32> to vector<8xf32>
    %99 = vector.shape_cast %98 : vector<8xf32> to vector<8x1xf32>
    %100 = vector.broadcast %99 : vector<8x1xf32> to vector<8x512xf32>
    %101 = arith.cmpf oge, %97, %100 : vector<8x512xf32>
    %cst_37 = arith.constant 0xFF800000 : f32
    %102 = vector.broadcast %cst_37 : f32 to vector<8x512xf32>
    %103 = arith.select %101, %102, %97 : vector<8x512xi1>, vector<8x512xf32>
    %c13_i32 = arith.constant 13 : i32
    %cst_38 = arith.constant dense<0xFF800000> : vector<8xf32>
    %104 = vector.multi_reduction <maximumf>, %103, %cst_38 [1] : vector<8x512xf32> to vector<8xf32>
    %105 = vector.shape_cast %104 : vector<8xf32> to vector<8x1xf32>
    %106 = vector.broadcast %105 : vector<8x1xf32> to vector<8x512xf32>
    %107 = arith.cmpf oge, %103, %106 : vector<8x512xf32>
    %cst_39 = arith.constant 0xFF800000 : f32
    %108 = vector.broadcast %cst_39 : f32 to vector<8x512xf32>
    %109 = arith.select %107, %108, %103 : vector<8x512xi1>, vector<8x512xf32>
    %c14_i32 = arith.constant 14 : i32
    %cst_40 = arith.constant dense<0xFF800000> : vector<8xf32>
    %110 = vector.multi_reduction <maximumf>, %109, %cst_40 [1] : vector<8x512xf32> to vector<8xf32>
    %111 = vector.shape_cast %110 : vector<8xf32> to vector<8x1xf32>
    %112 = vector.broadcast %111 : vector<8x1xf32> to vector<8x512xf32>
    %113 = arith.cmpf oge, %109, %112 : vector<8x512xf32>
    %cst_41 = arith.constant 0xFF800000 : f32
    %114 = vector.broadcast %cst_41 : f32 to vector<8x512xf32>
    %115 = arith.select %113, %114, %109 : vector<8x512xi1>, vector<8x512xf32>
    %cst_42 = arith.constant dense<0xFF800000> : vector<8xf32>
    %116 = vector.multi_reduction <maximumf>, %115, %cst_42 [1] : vector<8x512xf32> to vector<8xf32>
    %117 = vector.shape_cast %116 : vector<8xf32> to vector<8x1xf32>
    %cst_43 = arith.constant 0.000000e+00 : f32
    %118 = vector.broadcast %cst_43 : f32 to vector<8x1xf32>
    %119 = arith.maximumf %117, %118 : vector<8x1xf32>
    %120 = vector.broadcast %119 : vector<8x1xf32> to vector<8x512xf32>
    %121 = arith.cmpf oge, %25, %120 : vector<8x512xf32>
    %cst_44 = arith.constant 0.000000e+00 : f32
    %122 = vector.broadcast %cst_44 : f32 to vector<8x512xf32>
    %123 = arith.select %121, %25, %122 : vector<8x512xi1>, vector<8x512xf32>
    %c0_45 = arith.constant 0 : index
    %c0_46 = arith.constant 0 : index
    %124 = vector.load %arg3[%c0_45, %c0_46] : memref<512x128xf32, #tpu.memory_space<vmem>>, vector<512x128xf32>
    %cst_47 = arith.constant dense<0.000000e+00> : vector<8x128xf32>
    %125 = tpu.matmul %123, %124, %cst_47 {dimension_numbers = #tpu.dot_dimension_numbers<[1], [0], [0], [1], [0, 0, 1, 1], [], []>} : vector<8x512xf32>, vector<512x128xf32>, vector<8x128xf32> -> vector<8x128xf32>
    %126 = vector.broadcast %16 : vector<1x128xf32> to vector<8x128xf32>
    %127 = arith.addf %125, %126 : vector<8x128xf32>
    %128 = vector.broadcast %12 : vector<8x1xf32> to vector<8x128xf32>
    %129 = arith.mulf %127, %128 : vector<8x128xf32>
    %130 = vector.broadcast %4 : vector<8x1xf32> to vector<8x128xf32>
    %131 = arith.addf %129, %130 : vector<8x128xf32>
    %c0_48 = arith.constant 0 : index
    %c0_49 = arith.constant 0 : index
    %132 = vector.load %arg6[%c0_48, %c0_49] : memref<8x128xf32, #tpu.memory_space<vmem>>, vector<8x128xf32>
    tpu.vector_store %arg6[%c0_48, %c0_49], %131 {strides = array<i32>} : memref<8x128xf32, #tpu.memory_space<vmem>>, vector<8x128xf32>,
    return
  }
  func.func @transform_0(%arg0: i32) -> (i32, i32) {
    %c0_i32 = arith.constant 0 : i32
    %c0_i32_0 = arith.constant 0 : i32
    return %arg0, %c0_i32 : i32, i32
  }
  func.func @transform_1(%arg0: i32) -> (i32, i32) {
    %c0_i32 = arith.constant 0 : i32
    %c0_i32_0 = arith.constant 0 : i32
    %c0_i32_1 = arith.constant 0 : i32
    return %c0_i32, %c0_i32_0 : i32, i32
  }
  func.func @transform_2(%arg0: i32) -> (i32, i32) {
    %c0_i32 = arith.constant 0 : i32
    %c0_i32_0 = arith.constant 0 : i32
    %c0_i32_1 = arith.constant 0 : i32
    return %c0_i32, %c0_i32_0 : i32, i32
  }
  func.func @transform_3(%arg0: i32) -> (i32, i32) {
    %c0_i32 = arith.constant 0 : i32
    %c0_i32_0 = arith.constant 0 : i32
    %c0_i32_1 = arith.constant 0 : i32
    return %c0_i32, %c0_i32_0 : i32, i32
  }
  func.func @transform_4(%arg0: i32) -> (i32, i32) {
    %c0_i32 = arith.constant 0 : i32
    %c0_i32_0 = arith.constant 0 : i32
    %c0_i32_1 = arith.constant 0 : i32
    return %c0_i32, %c0_i32_0 : i32, i32
  }
  func.func @transform_5(%arg0: i32) -> (i32, i32) {
    %c0_i32 = arith.constant 0 : i32
    %c0_i32_0 = arith.constant 0 : i32
    return %arg0, %c0_i32 : i32, i32
  }
}

</mosaic_0001>

<llo_original>
// kernel: tpu_custom_call.1
$region0: #{tpu_custom_call.1}
  #allocation0 [shape = 'u32[]', space=smem, size = 0x4, offset = 0x4, fixed_abs, tag = 'smem constant byte address 0x4 - core index']
  #allocation1 [shape = 'u32[144,128]{1,0:T(1,128)}', space=vmem, size = 0x12000, scoped, tag = 'internal scratch']
  %s0 = inlined_call_operand.hbm [shape: f32[16,128], index: 0, kind: input, shape index: {}]
  %s1 = inlined_call_operand.hbm [shape: f32[128,512], index: 1, kind: input, shape index: {}]
  %s2 = inlined_call_operand.hbm [shape: f32[512,128], index: 2, kind: input, shape index: {}]
  %s3 = inlined_call_operand.vmem [shape: f32[1,512], index: 3, kind: input, shape index: {}]
  %s4 = inlined_call_operand.vmem [shape: f32[1,128], index: 4, kind: input, shape index: {}]
  %s5 = inlined_call_operand.hbm [shape: f32[16,128], index: 5, kind: output, shape index: {}]
  %s6 = sld [smem:[#allocation0]]
  $region65: #{tpu_custom_call.1} parent=0
    _
  %s8 = ssub.s32 1, %s6
  %s9 = scalar_select 0, %s8, %s6
  $region1: #{tpu_custom_call.1} parent=0
    #allocation2 [shape = 'u8[8192]{0}', space=vmem, size = 0x2000, scoped, tag = 'input window, operand 0']
    #allocation3 [shape = 's32[2]{0}', space=sflag, size = 0x8, scoped, tag = 'scoped memory for tpu_custom_call.1']
    #allocation4 [shape = 's32[2]{0}', space=sflag, size = 0x8, scoped, tag = 'scoped memory for tpu_custom_call.1']
    #allocation5 [shape = 'u8[262144]{0}', space=vmem, size = 0x40000, scoped, tag = 'input window, operand 1, single buffered']
    #allocation6 [shape = 's32[1]{0}', space=sflag, size = 0x4, scoped, tag = 'scoped memory for tpu_custom_call.1']
    #allocation7 [shape = 'u8[262144]{0}', space=vmem, size = 0x40000, scoped, tag = 'input window, operand 2, single buffered']
    #allocation8 [shape = 'u8[8192]{0}', space=vmem, size = 0x2000, scoped, tag = 'output window, operand 0']
    %10 = vsyncpa [#allocation3], 0
    %s11 = scalar_lea.sflag [#allocation3], 1
    %12 = vsyncpa %s11, 0
    %13 = vsyncpa [#allocation6], 0
    %14 = vsyncpa [#allocation4], 0
    %s15 = scalar_lea.sflag [#allocation4], 1
    %16 = vsyncpa %s15, 0
    loop: start=0, step=1, limit=4
    $region2: #{tpu_custom_call.1} parent=1 // loop_pre_header
      _
    $region3: #{tpu_custom_call.1} parent=1 // loop_header
      %s18 = sphi 0, %s22
      %p19 = scmp.ge.s32.totalorder %s18, 4
      %s28 = sphi 0, %s30
      %s31 = sphi 0, %s28
      %s32 = sphi 0, %s31
      %s48 = sphi 0, %s32
      %s52 = sphi 0, %s52
      %s54 = sphi 0, %s52
      %s55 = sphi 0, %s54
      %s69 = sphi 0, %s55
      %s73 = sphi 0, %s73
      %s75 = sphi 0, %s73
      %s76 = sphi 0, %s75
      %s90 = sphi 0, %s76
      %s94 = sphi 0, %s94
      %s96 = sphi 0, %s94
      %s97 = sphi 0, %s96
      %s111 = sphi 0, %s97
      %s115 = sphi 0, %s115
      %s117 = sphi 0, %s115
      %s118 = sphi 0, %s117
      %s132 = sphi 0, %s118
      %s138 = sphi 0, %s140
      %s141 = sphi 0, %s138
      %s142 = sphi 0, %s141
      %s158 = sphi 0, %s142
    $region4: #{tpu_custom_call.1} parent=1 // loop_header_branch
      %21 = sbr.rel (%p19) target = $region8
    $region5: #{tpu_custom_call.1} parent=1 // loop_body
      %s23 = ssub.s32 %s18, 1
      %s24 = ssub.s32 %s18, 2
      %s25 = sadd.s32 %s18, 1
      %s26 = ssub.s32 %s18, %s25
      %p27 = scmp.eq.s32.totalorder %s26, 0
      %s29 = sadd.s32 %s28, 1
      %s30 = scalar_select %p27, %s28, %s29
      %p33 = pneg %p27
      %p34 = scmp.eq.s32.totalorder %s18, 1
      %p35 = por %p33, %p34
      %p36 = scmp.ne.s32.totalorder %s28, %s31
      %p37 = scmp.eq.s32.totalorder %s18, 0
      %p38 = por %p36, %p37
      %p39 = scmp.ne.s32.totalorder %s28, %s31
      %p40 = scmp.eq.s32.totalorder %s23, 1
      %p41 = por %p39, %p40
      %p42 = scmp.ne.s32.totalorder %s31, %s32
      %p43 = scmp.eq.s32.totalorder %s23, 0
      %p44 = por %p42, %p43
      %p45 = scmp.ne.s32.totalorder %s31, %s32
      %p46 = scmp.eq.s32.totalorder %s24, 1
      %p47 = por %p45, %p46
      %p49 = scmp.ne.s32.totalorder %s32, %s48
      %p50 = scmp.eq.s32.totalorder %s24, 0
      %p51 = por %p49, %p50
      %s53 = sadd.s32 %s52, 1
      %p56 = scmp.eq.s32.totalorder %s18, 1
      %p57 = scmp.ne.s32.totalorder %s52, %s54
      %p58 = scmp.eq.s32.totalorder %s18, 0
      %p59 = por %p57, %p58
      %p60 = scmp.ne.s32.totalorder %s52, %s54
      %p61 = scmp.eq.s32.totalorder %s23, 1
      %p62 = por %p60, %p61
      %p63 = scmp.ne.s32.totalorder %s54, %s55
      %p64 = scmp.eq.s32.totalorder %s23, 0
      %p65 = por %p63, %p64
      %p66 = scmp.ne.s32.totalorder %s54, %s55
      %p67 = scmp.eq.s32.totalorder %s24, 1
      %p68 = por %p66, %p67
      %p70 = scmp.ne.s32.totalorder %s55, %s69
      %p71 = scmp.eq.s32.totalorder %s24, 0
      %p72 = por %p70, %p71
      %s74 = sadd.s32 %s73, 1
      %p77 = scmp.eq.s32.totalorder %s18, 1
      %p78 = scmp.ne.s32.totalorder %s73, %s75
      %p79 = scmp.eq.s32.totalorder %s18, 0
      %p80 = por %p78, %p79
      %p81 = scmp.ne.s32.totalorder %s73, %s75
      %p82 = scmp.eq.s32.totalorder %s23, 1
      %p83 = por %p81, %p82
      %p84 = scmp.ne.s32.totalorder %s75, %s76
      %p85 = scmp.eq.s32.totalorder %s23, 0
      %p86 = por %p84, %p85
      %p87 = scmp.ne.s32.totalorder %s75, %s76
      %p88 = scmp.eq.s32.totalorder %s24, 1
      %p89 = por %p87, %p88
      %p91 = scmp.ne.s32.totalorder %s76, %s90
      %p92 = scmp.eq.s32.totalorder %s24, 0
      %p93 = por %p91, %p92
      %s95 = sadd.s32 %s94, 1
      %p98 = scmp.eq.s32.totalorder %s18, 1
      %p99 = scmp.ne.s32.totalorder %s94, %s96
      %p100 = scmp.eq.s32.totalorder %s18, 0
      %p101 = por %p99, %p100
      %p102 = scmp.ne.s32.totalorder %s94, %s96
      %p103 = scmp.eq.s32.totalorder %s23, 1
      %p104 = por %p102, %p103
      %p105 = scmp.ne.s32.totalorder %s96, %s97
      %p106 = scmp.eq.s32.totalorder %s23, 0
      %p107 = por %p105, %p106
      %p108 = scmp.ne.s32.totalorder %s96, %s97
      %p109 = scmp.eq.s32.totalorder %s24, 1
      %p110 = por %p108, %p109
      %p112 = scmp.ne.s32.totalorder %s97, %s111
      %p113 = scmp.eq.s32.totalorder %s24, 0
      %p114 = por %p112, %p113
      %s116 = sadd.s32 %s115, 1
      %p119 = scmp.eq.s32.totalorder %s18, 1
      %p120 = scmp.ne.s32.totalorder %s115, %s117
      %p121 = scmp.eq.s32.totalorder %s18, 0
      %p122 = por %p120, %p121
      %p123 = scmp.ne.s32.totalorder %s115, %s117
      %p124 = scmp.eq.s32.totalorder %s23, 1
      %p125 = por %p123, %p124
      %p126 = scmp.ne.s32.totalorder %s117, %s118
      %p127 = scmp.eq.s32.totalorder %s23, 0
      %p128 = por %p126, %p127
      %p129 = scmp.ne.s32.totalorder %s117, %s118
      %p130 = scmp.eq.s32.totalorder %s24, 1
      %p131 = por %p129, %p130
      %p133 = scmp.ne.s32.totalorder %s118, %s132
      %p134 = scmp.eq.s32.totalorder %s24, 0
      %p135 = por %p133, %p134
      %s136 = ssub.s32 %s18, %s25
      %p137 = scmp.eq.s32.totalorder %s136, 0
      %s139 = sadd.s32 %s138, 1
      %s140 = scalar_select %p137, %s138, %s139
      %p143 = pneg %p137
      %p144 = scmp.eq.s32.totalorder %s18, 1
      %p145 = por %p143, %p144
      %p146 = scmp.ne.s32.totalorder %s138, %s141
      %p147 = scmp.eq.s32.totalorder %s18, 0
      %p148 = por %p146, %p147
      %p149 = scmp.ne.s32.totalorder %s138, %s141
      %p150 = scmp.eq.s32.totalorder %s23, 1
      %p151 = por %p149, %p150
      %p152 = scmp.ne.s32.totalorder %s141, %s142
      %p153 = scmp.eq.s32.totalorder %s23, 0
      %p154 = por %p152, %p153
      %p155 = scmp.ne.s32.totalorder %s141, %s142
      %p156 = scmp.eq.s32.totalorder %s24, 1
      %p157 = por %p155, %p156
      %p159 = scmp.ne.s32.totalorder %s142, %s158
      %p160 = scmp.eq.s32.totalorder %s24, 0
      %p161 = por %p159, %p160
      %p162 = scmp.le.s32.totalorder 1, %s18
      %p163 = scmp.lt.s32.totalorder %s18, 3
      %p164 = pnand %p162, %p163
      %p165 = pneg %p164
      // Predicated region
      $region9: #{tpu_custom_call.1} parent=5 // pred_check
        _
      $region10: #{tpu_custom_call.1} parent=5 // pred_check_branch
        %167 = sbr.rel (%p164) target = $region12
      $region11: #{tpu_custom_call.1} parent=5 // pred_region
        %s168 = ssub.s32 %s18, 1
        // Predicated region
        $region13: #{tpu_custom_call.1} parent=11 // pred_check
          %p169 = pneg %p65
        $region14: #{tpu_custom_call.1} parent=11 // pred_check_branch
          %171 = sbr.rel (%p169) target = $region16
        $region15: #{tpu_custom_call.1} parent=11 // pred_region
          %s173 = ssub.s32 8192, 8192
          %174 = vsyncadd [#allocation6], %s173
          %s175 = sshll.u32 [#allocation5], 4
          %s176 = int_to_ptr.vmem [resolvable:$true] %s175
          %181 = dma.hbm_to_vmem [thread:$0]  %s1, 8192, %s176, [#allocation6], 512, 512, 32
        $region16: #{tpu_custom_call.1} parent=11 // pred_fallthru
          _
        // Predicated region
        $region17: #{tpu_custom_call.1} parent=11 // pred_check
          %p182 = pneg %p86
        $region18: #{tpu_custom_call.1} parent=11 // pred_check_branch
          %184 = sbr.rel (%p182) target = $region20
        $region19: #{tpu_custom_call.1} parent=11 // pred_region
          %s186 = ssub.s32 8192, 8192
          %187 = vsyncadd [#allocation6], %s186
          %s188 = sshll.u32 [#allocation7], 4
          %s189 = int_to_ptr.vmem [resolvable:$true] %s188
          %194 = dma.hbm_to_vmem [thread:$0]  %s2, 8192, %s189, [#allocation6], 128, 128, 8
        $region20: #{tpu_custom_call.1} parent=11 // pred_fallthru
          _
        // Predicated region
        $region21: #{tpu_custom_call.1} parent=11 // pred_check
          %p195 = pneg %p107
        $region22: #{tpu_custom_call.1} parent=11 // pred_check_branch
          %197 = sbr.rel (%p195) target = $region24
        $region23: #{tpu_custom_call.1} parent=11 // pred_region
          _
        $region24: #{tpu_custom_call.1} parent=11 // pred_fallthru
          _
        // Predicated region
        $region25: #{tpu_custom_call.1} parent=11 // pred_check
          %p198 = pneg %p128
        $region26: #{tpu_custom_call.1} parent=11 // pred_check_branch
          %200 = sbr.rel (%p198) target = $region28
        $region27: #{tpu_custom_call.1} parent=11 // pred_region
          _
        $region28: #{tpu_custom_call.1} parent=11 // pred_fallthru
          _
      $region12: #{tpu_custom_call.1} parent=5 // pred_fallthru
        _
      %p201 = scmp.lt.s32.totalorder %s18, 2
      // Predicated region
      $region29: #{tpu_custom_call.1} parent=5 // pred_check
        %p202 = pneg %p201
      $region30: #{tpu_custom_call.1} parent=5 // pred_check_branch
        %204 = sbr.rel (%p202) target = $region32
      $region31: #{tpu_custom_call.1} parent=5 // pred_region
        // Predicated region
        $region33: #{tpu_custom_call.1} parent=31 // pred_check
          %p205 = pneg %p38
        $region34: #{tpu_custom_call.1} parent=31 // pred_check_branch
          %207 = sbr.rel (%p205) target = $region36
        $region35: #{tpu_custom_call.1} parent=31 // pred_region
          %s208 = sand.u32 %s28, 1
          %s209 = scalar_lea.sflag [#allocation3], %s208
          %s210 = sand.u32 %s28, 1
          %s211 = smul.addr %s210, 8
          %s212 = scalar_lea.vmem [#allocation2], %s211
          %s214 = ssub.s32 128, 128
          %215 = vsyncadd %s209, %s214
          %s216 = smul.addr %s18, 128
          %s217 = scalar_lea.hbm %s0, %s216
          %s219 = sshll.u32 %s212, 4
          %s220 = int_to_ptr.vmem [resolvable:$true] %s219
          %222 = dma.hbm_to_vmem [thread:$0]  %s217, 128, %s220, %s209
        $region36: #{tpu_custom_call.1} parent=31 // pred_fallthru
          _
      $region32: #{tpu_custom_call.1} parent=5 // pred_fallthru
        _
      %p223 = scmp.le.s32.totalorder 1, %s18
      %p224 = scmp.lt.s32.totalorder %s18, 3
      %p225 = pnand %p223, %p224
      %p226 = pneg %p225
      // Predicated region
      $region37: #{tpu_custom_call.1} parent=5 // pred_check
        _
      $region38: #{tpu_custom_call.1} parent=5 // pred_check_branch
        %228 = sbr.rel (%p225) target = $region40
      $region39: #{tpu_custom_call.1} parent=5 // pred_region
        %s229 = ssub.s32 %s18, 1
        %s230 = sand.u32 %s31, 1
        %s231 = scalar_lea.sflag [#allocation3], %s230
        %s232 = sand.u32 %s31, 1
        %s233 = smul.addr %s232, 8
        %s234 = scalar_lea.vmem [#allocation2], %s233
        // Predicated region
        $region41: #{tpu_custom_call.1} parent=39 // pred_check
          %p235 = pneg %p44
        $region42: #{tpu_custom_call.1} parent=39 // pred_check_branch
          %237 = sbr.rel (%p235) target = $region44
        $region43: #{tpu_custom_call.1} parent=39 // pred_region
          %238 = dma.done %s231, 128
        $region44: #{tpu_custom_call.1} parent=39 // pred_fallthru
          _
        // Predicated region
        $region45: #{tpu_custom_call.1} parent=39 // pred_check
          %p239 = pneg %p65
        $region46: #{tpu_custom_call.1} parent=39 // pred_check_branch
          %241 = sbr.rel (%p239) target = $region48
        $region47: #{tpu_custom_call.1} parent=39 // pred_region
          %242 = dma.done [#allocation6], 8192
        $region48: #{tpu_custom_call.1} parent=39 // pred_fallthru
          _
        // Predicated region
        $region49: #{tpu_custom_call.1} parent=39 // pred_check
          %p243 = pneg %p86
        $region50: #{tpu_custom_call.1} parent=39 // pred_check_branch
          %245 = sbr.rel (%p243) target = $region52
        $region51: #{tpu_custom_call.1} parent=39 // pred_region
          %246 = dma.done [#allocation6], 8192
        $region52: #{tpu_custom_call.1} parent=39 // pred_fallthru
          _
        %s247 = sand.u32 %s31, 1
        %s248 = scalar_lea.sflag [#allocation3], %s247
        %s249 = sand.u32 %s31, 1
        %s250 = smul.addr %s249, 8
        %s251 = scalar_lea.vmem [#allocation2], %s250
        %p252 = pneg %p44
        %p253 = pneg %p41
        %p254 = pneg %p65
        %p255 = pneg %p62
        %p256 = pneg %p86
        %p257 = pneg %p83
        %p258 = pneg %p107
        %p259 = pneg %p104
        %p260 = pneg %p128
        %p261 = pneg %p125
        %p262 = pneg %p154
        %p263 = pneg %p151
        %s264 = sand.u32 %s141, 1
        %s265 = scalar_lea.sflag [#allocation4], %s264
        %s266 = sand.u32 %s141, 1
        %s267 = smul.addr %s266, 8
        %s268 = scalar_lea.vmem [#allocation8], %s267
        %v269 = vld [vmem:[%s234] sm:$0xff]
        %270 = vadd.xlane.f32.xlu0 %v269
        %v271 = vpop.xlane.xlu0 %270
        %v272 = vrcp.pop 128.0
        %v273 = vmul.f32 %v271, %v272
        %v274 = vsub.f32 %v269, %v273
        %v275 = vmul.f32 %v274, %v274
        %276 = vadd.xlane.f32.xlu0 %v275
        %v277 = vpop.xlane.xlu0 %276
        %v278 = vmul.f32 %v277, 0.007874016
        %v279 = vrsqrt.pop %v278
        %v280 = vmul.f32 %v278, %v279
        %vm281 = vcmp.eq.f32.partialorder %v278, inf
        %v282 = vsel %vm281, %v278, %v280
        %vm283 = vcmp.eq.f32.partialorder %v278, 0.0
        %v284 = vand.u32 %v278, 2147483648
        %v285 = vsel %vm283, %v284, %v282
        %v286 = vadd.f32 %v285, 1e-05
        %v287 = vrcp.pop %v286
        %v288 = vld [vmem:[%s4] sm:$0x1]
        %v289 = vmul.f32 %v274, %v287
        %v291 = vlaneseq
        %v292 = vshrl.u32 %v291, 7
        %v293 = vsub.s32 0, %v292
        %v294 = vrot.slane %v288, %v293
        %v296 = vsub.f32 %v289, %v294
        %v297 = vld [vmem:[#allocation5] sm:$0xff]
        %v298 = vld [vmem:[#allocation5 + $0x8] sm:$0xff]
        %v299 = vld [vmem:[#allocation5 + $0x10] sm:$0xff]
        %v300 = vld [vmem:[#allocation5 + $0x18] sm:$0xff]
        %v301 = vld [vmem:[#allocation5 + $0x20] sm:$0xff]
        %v302 = vld [vmem:[#allocation5 + $0x28] sm:$0xff]
        %v303 = vld [vmem:[#allocation5 + $0x30] sm:$0xff]
        %v304 = vld [vmem:[#allocation5 + $0x38] sm:$0xff]
        %v305 = vld [vmem:[#allocation5 + $0x40] sm:$0xff]
        %v306 = vld [vmem:[#allocation5 + $0x48] sm:$0xff]
        %v307 = vld [vmem:[#allocation5 + $0x50] sm:$0xff]
        %v308 = vld [vmem:[#allocation5 + $0x58] sm:$0xff]
        %v309 = vld [vmem:[#allocation5 + $0x60] sm:$0xff]
        %v310 = vld [vmem:[#allocation5 + $0x68] sm:$0xff]
        %v311 = vld [vmem:[#allocation5 + $0x70] sm:$0xff]
        %v312 = vld [vmem:[#allocation5 + $0x78] sm:$0xff]
        %v313 = vld [vmem:[#allocation5 + $0x80] sm:$0xff]
        %v314 = vld [vmem:[#allocation5 + $0x88] sm:$0xff]
        %v315 = vld [vmem:[#allocation5 + $0x90] sm:$0xff]
        %v316 = vld [vmem:[#allocation5 + $0x98] sm:$0xff]
        %v317 = vld [vmem:[#allocation5 + $0xa0] sm:$0xff]
        %v318 = vld [vmem:[#allocation5 + $0xa8] sm:$0xff]
        %v319 = vld [vmem:[#allocation5 + $0xb0] sm:$0xff]
        %v320 = vld [vmem:[#allocation5 + $0xb8] sm:$0xff]
        %v321 = vld [vmem:[#allocation5 + $0xc0] sm:$0xff]
        %v322 = vld [vmem:[#allocation5 + $0xc8] sm:$0xff]
        %v323 = vld [vmem:[#allocation5 + $0xd0] sm:$0xff]
        %v324 = vld [vmem:[#allocation5 + $0xd8] sm:$0xff]
        %v325 = vld [vmem:[#allocation5 + $0xe0] sm:$0xff]
        %v326 = vld [vmem:[#allocation5 + $0xe8] sm:$0xff]
        %v327 = vld [vmem:[#allocation5 + $0xf0] sm:$0xff]
        %v328 = vld [vmem:[#allocation5 + $0xf8] sm:$0xff]
        %v329 = vld [vmem:[#allocation5 + $0x100] sm:$0xff]
        %v330 = vld [vmem:[#allocation5 + $0x108] sm:$0xff]
        %v331 = vld [vmem:[#allocation5 + $0x110] sm:$0xff]
        %v332 = vld [vmem:[#allocation5 + $0x118] sm:$0xff]
        %v333 = vld [vmem:[#allocation5 + $0x120] sm:$0xff]
        %v334 = vld [vmem:[#allocation5 + $0x128] sm:$0xff]
        %v335 = vld [vmem:[#allocation5 + $0x130] sm:$0xff]
        %v336 = vld [vmem:[#allocation5 + $0x138] sm:$0xff]
        %v337 = vld [vmem:[#allocation5 + $0x140] sm:$0xff]
        %v338 = vld [vmem:[#allocation5 + $0x148] sm:$0xff]
        %v339 = vld [vmem:[#allocation5 + $0x150] sm:$0xff]
        %v340 = vld [vmem:[#allocation5 + $0x158] sm:$0xff]
        %v341 = vld [vmem:[#allocation5 + $0x160] sm:$0xff]
        %v342 = vld [vmem:[#allocation5 + $0x168] sm:$0xff]
        %v343 = vld [vmem:[#allocation5 + $0x170] sm:$0xff]
        %v344 = vld [vmem:[#allocation5 + $0x178] sm:$0xff]
        %v345 = vld [vmem:[#allocation5 + $0x180] sm:$0xff]
        %v346 = vld [vmem:[#allocation5 + $0x188] sm:$0xff]
        %v347 = vld [vmem:[#allocation5 + $0x190] sm:$0xff]
        %v348 = vld [vmem:[#allocation5 + $0x198] sm:$0xff]
        %v349 = vld [vmem:[#allocation5 + $0x1a0] sm:$0xff]
        %v350 = vld [vmem:[#allocation5 + $0x1a8] sm:$0xff]
        %v351 = vld [vmem:[#allocation5 + $0x1b0] sm:$0xff]
        %v352 = vld [vmem:[#allocation5 + $0x1b8] sm:$0xff]
        %v353 = vld [vmem:[#allocation5 + $0x1c0] sm:$0xff]
        %v354 = vld [vmem:[#allocation5 + $0x1c8] sm:$0xff]
        %v355 = vld [vmem:[#allocation5 + $0x1d0] sm:$0xff]
        %v356 = vld [vmem:[#allocation5 + $0x1d8] sm:$0xff]
        %v357 = vld [vmem:[#allocation5 + $0x1e0] sm:$0xff]
        %v358 = vld [vmem:[#allocation5 + $0x1e8] sm:$0xff]
        %v359 = vld [vmem:[#allocation5 + $0x1f0] sm:$0xff]
        %v360 = vld [vmem:[#allocation5 + $0x1f8] sm:$0xff]
        %v361 = vld [vmem:[%s3] sm:$0xf]
        %v363 = vlaneseq
        %v364 = vshrl.u32 %v363, 7
        %v365 = vsub.s32 0, %v364
        %v366 = vrot.slane %v361, %v365
        %v367 = vlaneseq
        %v368 = vshrl.u32 %v367, 7
        %v369 = vsub.s32 1, %v368
        %v370 = vrot.slane %v361, %v369
        %v371 = vlaneseq
        %v372 = vshrl.u32 %v371, 7
        %v373 = vsub.s32 2, %v372
        %v374 = vrot.slane %v361, %v373
        %v375 = vlaneseq
        %v376 = vshrl.u32 %v375, 7
        %v377 = vsub.s32 3, %v376
        %v378 = vrot.slane %v361, %v377
        %383 = vmatprep.subr.mxu0 %v298
        %384 = vmatpush1.msra.mxu0 %v297
        %385 = vmatprep.subr.mxu0 %v302
        %386 = vmatpush1.msra.mxu0 %v301
        %387 = vmatprep.subr.mxu0 %v306
        %388 = vmatpush1.msra.mxu0 %v305
        %389 = vmatprep.subr.mxu0 %v310
        %390 = vmatpush1.msra.mxu0 %v309
        %391 = vmatprep.subr.mxu0 %v314
        %392 = vmatpush1.msra.mxu0 %v313
        %393 = vmatprep.subr.mxu0 %v318
        %394 = vmatpush1.msra.mxu0 %v317
        %395 = vmatprep.subr.mxu0 %v322
        %396 = vmatpush1.msra.mxu0 %v321
        %397 = vmatprep.subr.mxu0 %v326
        %398 = vmatpush1.msra.mxu0 %v325
        %399 = vmatprep.subr.mxu0 %v330
        %400 = vmatpush1.msra.mxu0 %v329
        %401 = vmatprep.subr.mxu0 %v334
        %402 = vmatpush1.msra.mxu0 %v333
        %403 = vmatprep.subr.mxu0 %v338
        %404 = vmatpush1.msra.mxu0 %v337
        %405 = vmatprep.subr.mxu0 %v342
        %406 = vmatpush1.msra.mxu0 %v341
        %407 = vmatprep.subr.mxu0 %v346
        %408 = vmatpush1.msra.mxu0 %v345
        %409 = vmatprep.subr.mxu0 %v350
        %410 = vmatpush1.msra.mxu0 %v349
        %411 = vmatprep.subr.mxu0 %v354
        %412 = vmatpush1.msra.mxu0 %v353
        %413 = vmatprep.subr.mxu0 %v358
        %414 = vmatpush1.msra.mxu0 %v357
        %415 = vmatprep.subr.mxu0 0.0
        %416 = vmatpush1.msra.mxu0 0.0
        %417 = vmatprep.subr.mxu0 0.0
        %418 = vmatpush1.msra.mxu0 0.0
        %419 = vmatprep.subr.mxu0 0.0
        %420 = vmatpush1.msra.mxu0 0.0
        %421 = vmatprep.subr.mxu0 0.0
        %422 = vmatpush1.msra.mxu0 0.0
        %423 = vmatprep.subr.mxu0 0.0
        %424 = vmatpush1.msra.mxu0 0.0
        %425 = vmatprep.subr.mxu0 0.0
        %426 = vmatpush1.msra.mxu0 0.0
        %427 = vmatprep.subr.mxu0 0.0
        %428 = vmatpush1.msra.mxu0 0.0
        %429 = vmatprep.subr.mxu0 0.0
        %430 = vmatpush1.msra.mxu0 0.0
        %431 = vmatprep.subr.mxu0 0.0
        %432 = vmatpush1.msra.mxu0 0.0
        %433 = vmatprep.subr.mxu0 0.0
        %434 = vmatpush1.msra.mxu0 0.0
        %435 = vmatprep.subr.mxu0 0.0
        %436 = vmatpush1.msra.mxu0 0.0
        %437 = vmatprep.subr.mxu0 0.0
        %438 = vmatpush1.msra.mxu0 0.0
        %439 = vmatprep.subr.mxu0 0.0
        %440 = vmatpush1.msra.mxu0 0.0
        %441 = vmatprep.subr.mxu0 0.0
        %442 = vmatpush1.msra.mxu0 0.0
        %443 = vmatprep.subr.mxu0 0.0
        %444 = vmatpush1.msra.mxu0 0.0
        %445 = vmatprep.subr.mxu0 0.0
        %446 = vmatpush1.msra.mxu0 0.0
        %447 = vmatprep.mubr.f32.mxu0 0.0
        %448 = vmatmul.mubr.f32.gmra.mrb[0].mxu0 %v296
        %v449 = vpop.f32.mrb[0].mxu0
        %v450 = vadd.f32 %v366, %v449
        %v451 = vpop.f32.mrb[0].mxu0
        %v452 = vadd.f32 %v370, %v451
        %453 = vdwg.mxu0
        %454 = vmatprep.subr.mxu0 %v300
        %455 = vmatpush1.msra.mxu0 %v299
        %456 = vmatprep.subr.mxu0 %v304
        %457 = vmatpush1.msra.mxu0 %v303
        %458 = vmatprep.subr.mxu0 %v308
        %459 = vmatpush1.msra.mxu0 %v307
        %460 = vmatprep.subr.mxu0 %v312
        %461 = vmatpush1.msra.mxu0 %v311
        %462 = vmatprep.subr.mxu0 %v316
        %463 = vmatpush1.msra.mxu0 %v315
        %464 = vmatprep.subr.mxu0 %v320
        %465 = vmatpush1.msra.mxu0 %v319
        %466 = vmatprep.subr.mxu0 %v324
        %467 = vmatpush1.msra.mxu0 %v323
        %468 = vmatprep.subr.mxu0 %v328
        %469 = vmatpush1.msra.mxu0 %v327
        %470 = vmatprep.subr.mxu0 %v332
        %471 = vmatpush1.msra.mxu0 %v331
        %472 = vmatprep.subr.mxu0 %v336
        %473 = vmatpush1.msra.mxu0 %v335
        %474 = vmatprep.subr.mxu0 %v340
        %475 = vmatpush1.msra.mxu0 %v339
        %476 = vmatprep.subr.mxu0 %v344
        %477 = vmatpush1.msra.mxu0 %v343
        %478 = vmatprep.subr.mxu0 %v348
        %479 = vmatpush1.msra.mxu0 %v347
        %480 = vmatprep.subr.mxu0 %v352
        %481 = vmatpush1.msra.mxu0 %v351
        %482 = vmatprep.subr.mxu0 %v356
        %483 = vmatpush1.msra.mxu0 %v355
        %484 = vmatprep.subr.mxu0 %v360
        %485 = vmatpush1.msra.mxu0 %v359
        %486 = vmatprep.subr.mxu0 0.0
        %487 = vmatpush1.msra.mxu0 0.0
        %488 = vmatprep.subr.mxu0 0.0
        %489 = vmatpush1.msra.mxu0 0.0
        %490 = vmatprep.subr.mxu0 0.0
        %491 = vmatpush1.msra.mxu0 0.0
        %492 = vmatprep.subr.mxu0 0.0
        %493 = vmatpush1.msra.mxu0 0.0
        %494 = vmatprep.subr.mxu0 0.0
        %495 = vmatpush1.msra.mxu0 0.0
        %496 = vmatprep.subr.mxu0 0.0
        %497 = vmatpush1.msra.mxu0 0.0
        %498 = vmatprep.subr.mxu0 0.0
        %499 = vmatpush1.msra.mxu0 0.0
        %500 = vmatprep.subr.mxu0 0.0
        %501 = vmatpush1.msra.mxu0 0.0
        %502 = vmatprep.subr.mxu0 0.0
        %503 = vmatpush1.msra.mxu0 0.0
        %504 = vmatprep.subr.mxu0 0.0
        %505 = vmatpush1.msra.mxu0 0.0
        %506 = vmatprep.subr.mxu0 0.0
        %507 = vmatpush1.msra.mxu0 0.0
        %508 = vmatprep.subr.mxu0 0.0
        %509 = vmatpush1.msra.mxu0 0.0
        %510 = vmatprep.subr.mxu0 0.0
        %511 = vmatpush1.msra.mxu0 0.0
        %512 = vmatprep.subr.mxu0 0.0
        %513 = vmatpush1.msra.mxu0 0.0
        %514 = vmatprep.subr.mxu0 0.0
        %515 = vmatpush1.msra.mxu0 0.0
        %516 = vmatprep.subr.mxu0 0.0
        %517 = vmatpush1.msra.mxu0 0.0
        %518 = vmatprep.mubr.f32.mxu0 0.0
        %519 = vmatmul.mubr.f32.gmra.mrb[0].mxu0 %v296
        %v520 = vpop.f32.mrb[0].mxu0
        %v521 = vadd.f32 %v374, %v520
        %v522 = vpop.f32.mrb[0].mxu0
        %v523 = vadd.f32 %v378, %v522
        %524 = vdwg.mxu0
        %v525 = vmax.f32 %v450, %v452
        %v526 = vmax.f32 %v521, %v523
        %v527 = vmax.f32 %v525, %v526
        %528 = vmax.xlane.f32.xlu0 %v527
        %v529 = vpop.xlane.xlu0 %528
        %vm530 = vcmp.ge.f32.partialorder %v450, %v529
        %vm531 = vcmp.ge.f32.partialorder %v452, %v529
        %vm532 = vcmp.ge.f32.partialorder %v521, %v529
        %vm533 = vcmp.ge.f32.partialorder %v523, %v529
        %v534 = vsel %vm530, -inf, %v450
        %v535 = vsel %vm531, -inf, %v452
        %v536 = vsel %vm532, -inf, %v521
        %v537 = vsel %vm533, -inf, %v523
        %v538 = vmax.f32 %v534, %v535
        %v539 = vmax.f32 %v536, %v537
        %v540 = vmax.f32 %v538, %v539
        %541 = vmax.xlane.f32.xlu0 %v540
        %v542 = vpop.xlane.xlu0 %541
        %vm543 = vcmp.ge.f32.partialorder %v534, %v542
        %vm544 = vcmp.ge.f32.partialorder %v535, %v542
        %vm545 = vcmp.ge.f32.partialorder %v536, %v542
        %vm546 = vcmp.ge.f32.partialorder %v537, %v542
        %v547 = vsel %vm543, -inf, %v534
        %v548 = vsel %vm544, -inf, %v535
        %v549 = vsel %vm545, -inf, %v536
        %v550 = vsel %vm546, -inf, %v537
        %v551 = vmax.f32 %v547, %v548
        %v552 = vmax.f32 %v549, %v550
        %v553 = vmax.f32 %v551, %v552
        %554 = vmax.xlane.f32.xlu0 %v553
        %v555 = vpop.xlane.xlu0 %554
        %vm556 = vcmp.ge.f32.partialorder %v547, %v555
        %vm557 = vcmp.ge.f32.partialorder %v548, %v555
        %vm558 = vcmp.ge.f32.partialorder %v549, %v555
        %vm559 = vcmp.ge.f32.partialorder %v550, %v555
        %v560 = vsel %vm556, -inf, %v547
        %v561 = vsel %vm557, -inf, %v548
        %v562 = vsel %vm558, -inf, %v549
        %v563 = vsel %vm559, -inf, %v550
        %v564 = vmax.f32 %v560, %v561
        %v565 = vmax.f32 %v562, %v563
        %v566 = vmax.f32 %v564, %v565
        %567 = vmax.xlane.f32.xlu0 %v566
        %v568 = vpop.xlane.xlu0 %567
        %vm569 = vcmp.ge.f32.partialorder %v560, %v568
        %vm570 = vcmp.ge.f32.partialorder %v561, %v568
        %vm571 = vcmp.ge.f32.partialorder %v562, %v568
        %vm572 = vcmp.ge.f32.partialorder %v563, %v568
        %v573 = vsel %vm569, -inf, %v560
        %v574 = vsel %vm570, -inf, %v561
        %v575 = vsel %vm571, -inf, %v562
        %v576 = vsel %vm572, -inf, %v563
        %v577 = vmax.f32 %v573, %v574
        %v578 = vmax.f32 %v575, %v576
        %v579 = vmax.f32 %v577, %v578
        %580 = vmax.xlane.f32.xlu0 %v579
        %v581 = vpop.xlane.xlu0 %580
        %vm582 = vcmp.ge.f32.partialorder %v573, %v581
        %vm583 = vcmp.ge.f32.partialorder %v574, %v581
        %vm584 = vcmp.ge.f32.partialorder %v575, %v581
        %vm585 = vcmp.ge.f32.partialorder %v576, %v581
        %v586 = vsel %vm582, -inf, %v573
        %v587 = vsel %vm583, -inf, %v574
        %v588 = vsel %vm584, -inf, %v575
        %v589 = vsel %vm585, -inf, %v576
        %v590 = vmax.f32 %v586, %v587
        %v591 = vmax.f32 %v588, %v589
        %v592 = vmax.f32 %v590, %v591
        %593 = vmax.xlane.f32.xlu0 %v592
        %v594 = vpop.xlane.xlu0 %593
        %vm595 = vcmp.ge.f32.partialorder %v586, %v594
        %vm596 = vcmp.ge.f32.partialorder %v587, %v594
        %vm597 = vcmp.ge.f32.partialorder %v588, %v594
        %vm598 = vcmp.ge.f32.partialorder %v589, %v594
        %v599 = vsel %vm595, -inf, %v586
        %v600 = vsel %vm596, -inf, %v587
        %v601 = vsel %vm597, -inf, %v588
        %v602 = vsel %vm598, -inf, %v589
        %v603 = vmax.f32 %v599, %v600
        %v604 = vmax.f32 %v601, %v602
        %v605 = vmax.f32 %v603, %v604
        %606 = vmax.xlane.f32.xlu0 %v605
        %v607 = vpop.xlane.xlu0 %606
        %vm608 = vcmp.ge.f32.partialorder %v599, %v607
        %vm609 = vcmp.ge.f32.partialorder %v600, %v607
        %vm610 = vcmp.ge.f32.partialorder %v601, %v607
        %vm611 = vcmp.ge.f32.partialorder %v602, %v607
        %v612 = vsel %vm608, -inf, %v599
        %v613 = vsel %vm609, -inf, %v600
        %v614 = vsel %vm610, -inf, %v601
        %v615 = vsel %vm611, -inf, %v602
        %v616 = vmax.f32 %v612, %v613
        %v617 = vmax.f32 %v614, %v615
        %v618 = vmax.f32 %v616, %v617
        %619 = vmax.xlane.f32.xlu0 %v618
        %v620 = vpop.xlane.xlu0 %619
        %vm621 = vcmp.ge.f32.partialorder %v612, %v620
        %vm622 = vcmp.ge.f32.partialorder %v613, %v620
        %vm623 = vcmp.ge.f32.partialorder %v614, %v620
        %vm624 = vcmp.ge.f32.partialorder %v615, %v620
        %v625 = vsel %vm621, -inf, %v612
        %v626 = vsel %vm622, -inf, %v613
        %v627 = vsel %vm623, -inf, %v614
        %v628 = vsel %vm624, -inf, %v615
        %v629 = vmax.f32 %v625, %v626
        %v630 = vmax.f32 %v627, %v628
        %v631 = vmax.f32 %v629, %v630
        %632 = vmax.xlane.f32.xlu0 %v631
        %v633 = vpop.xlane.xlu0 %632
        %vm634 = vcmp.ge.f32.partialorder %v625, %v633
        %vm635 = vcmp.ge.f32.partialorder %v626, %v633
        %vm636 = vcmp.ge.f32.partialorder %v627, %v633
        %vm637 = vcmp.ge.f32.partialorder %v628, %v633
        %v638 = vsel %vm634, -inf, %v625
        %v639 = vsel %vm635, -inf, %v626
        %v640 = vsel %vm636, -inf, %v627
        %v641 = vsel %vm637, -inf, %v628
        %v642 = vmax.f32 %v638, %v639
        %v643 = vmax.f32 %v640, %v641
        %v644 = vmax.f32 %v642, %v643
        %645 = vmax.xlane.f32.xlu0 %v644
        %v646 = vpop.xlane.xlu0 %645
        %vm647 = vcmp.ge.f32.partialorder %v638, %v646
        %vm648 = vcmp.ge.f32.partialorder %v639, %v646
        %vm649 = vcmp.ge.f32.partialorder %v640, %v646
        %vm650 = vcmp.ge.f32.partialorder %v641, %v646
        %v651 = vsel %vm647, -inf, %v638
        %v652 = vsel %vm648, -inf, %v639
        %v653 = vsel %vm649, -inf, %v640
        %v654 = vsel %vm650, -inf, %v641
        %v655 = vmax.f32 %v651, %v652
        %v656 = vmax.f32 %v653, %v654
        %v657 = vmax.f32 %v655, %v656
        %658 = vmax.xlane.f32.xlu0 %v657
        %v659 = vpop.xlane.xlu0 %658
        %vm660 = vcmp.ge.f32.partialorder %v651, %v659
        %vm661 = vcmp.ge.f32.partialorder %v652, %v659
        %vm662 = vcmp.ge.f32.partialorder %v653, %v659
        %vm663 = vcmp.ge.f32.partialorder %v654, %v659
        %v664 = vsel %vm660, -inf, %v651
        %v665 = vsel %vm661, -inf, %v652
        %v666 = vsel %vm662, -inf, %v653
        %v667 = vsel %vm663, -inf, %v654
        %v668 = vmax.f32 %v664, %v665
        %v669 = vmax.f32 %v666, %v667
        %v670 = vmax.f32 %v668, %v669
        %671 = vmax.xlane.f32.xlu0 %v670
        %v672 = vpop.xlane.xlu0 %671
        %vm673 = vcmp.ge.f32.partialorder %v664, %v672
        %vm674 = vcmp.ge.f32.partialorder %v665, %v672
        %vm675 = vcmp.ge.f32.partialorder %v666, %v672
        %vm676 = vcmp.ge.f32.partialorder %v667, %v672
        %v677 = vsel %vm673, -inf, %v664
        %v678 = vsel %vm674, -inf, %v665
        %v679 = vsel %vm675, -inf, %v666
        %v680 = vsel %vm676, -inf, %v667
        %v681 = vmax.f32 %v677, %v678
        %v682 = vmax.f32 %v679, %v680
        %v683 = vmax.f32 %v681, %v682
        %684 = vmax.xlane.f32.xlu0 %v683
        %v685 = vpop.xlane.xlu0 %684
        %vm686 = vcmp.ge.f32.partialorder %v677, %v685
        %vm687 = vcmp.ge.f32.partialorder %v678, %v685
        %vm688 = vcmp.ge.f32.partialorder %v679, %v685
        %vm689 = vcmp.ge.f32.partialorder %v680, %v685
        %v690 = vsel %vm686, -inf, %v677
        %v691 = vsel %vm687, -inf, %v678
        %v692 = vsel %vm688, -inf, %v679
        %v693 = vsel %vm689, -inf, %v680
        %v694 = vmax.f32 %v690, %v691
        %v695 = vmax.f32 %v692, %v693
        %v696 = vmax.f32 %v694, %v695
        %697 = vmax.xlane.f32.xlu0 %v696
        %v698 = vpop.xlane.xlu0 %697
        %vm699 = vcmp.ge.f32.partialorder %v690, %v698
        %vm700 = vcmp.ge.f32.partialorder %v691, %v698
        %vm701 = vcmp.ge.f32.partialorder %v692, %v698
        %vm702 = vcmp.ge.f32.partialorder %v693, %v698
        %v703 = vsel %vm699, -inf, %v690
        %v704 = vsel %vm700, -inf, %v691
        %v705 = vsel %vm701, -inf, %v692
        %v706 = vsel %vm702, -inf, %v693
        %v707 = vmax.f32 %v703, %v704
        %v708 = vmax.f32 %v705, %v706
        %v709 = vmax.f32 %v707, %v708
        %710 = vmax.xlane.f32.xlu0 %v709
        %v711 = vpop.xlane.xlu0 %710
        %vm712 = vcmp.ge.f32.partialorder %v703, %v711
        %vm713 = vcmp.ge.f32.partialorder %v704, %v711
        %vm714 = vcmp.ge.f32.partialorder %v705, %v711
        %vm715 = vcmp.ge.f32.partialorder %v706, %v711
        %v716 = vsel %vm712, -inf, %v703
        %v717 = vsel %vm713, -inf, %v704
        %v718 = vsel %vm714, -inf, %v705
        %v719 = vsel %vm715, -inf, %v706
        %v720 = vmax.f32 %v716, %v717
        %v721 = vmax.f32 %v718, %v719
        %v722 = vmax.f32 %v720, %v721
        %723 = vmax.xlane.f32.xlu0 %v722
        %v724 = vpop.xlane.xlu0 %723
        %v725 = vmax.f32 %v724, 0.0
        %vm726 = vcmp.ge.f32.partialorder %v450, %v725
        %vm727 = vcmp.ge.f32.partialorder %v452, %v725
        %vm728 = vcmp.ge.f32.partialorder %v521, %v725
        %vm729 = vcmp.ge.f32.partialorder %v523, %v725
        %v730 = vsel %vm726, %v450, 0.0
        %v731 = vsel %vm727, %v452, 0.0
        %v732 = vsel %vm728, %v521, 0.0
        %v733 = vsel %vm729, %v523, 0.0
        %v734 = vld [vmem:[#allocation7] sm:$0xff]
        %v735 = vld [vmem:[#allocation7 + $0x8] sm:$0xff]
        %v736 = vld [vmem:[#allocation7 + $0x10] sm:$0xff]
        %v737 = vld [vmem:[#allocation7 + $0x18] sm:$0xff]
        %v738 = vld [vmem:[#allocation7 + $0x20] sm:$0xff]
        %v739 = vld [vmem:[#allocation7 + $0x28] sm:$0xff]
        %v740 = vld [vmem:[#allocation7 + $0x30] sm:$0xff]
        %v741 = vld [vmem:[#allocation7 + $0x38] sm:$0xff]
        %v742 = vld [vmem:[#allocation7 + $0x40] sm:$0xff]
        %v743 = vld [vmem:[#allocation7 + $0x48] sm:$0xff]
        %v744 = vld [vmem:[#allocation7 + $0x50] sm:$0xff]
        %v745 = vld [vmem:[#allocation7 + $0x58] sm:$0xff]
        %v746 = vld [vmem:[#allocation7 + $0x60] sm:$0xff]
        %v747 = vld [vmem:[#allocation7 + $0x68] sm:$0xff]
        %v748 = vld [vmem:[#allocation7 + $0x70] sm:$0xff]
        %v749 = vld [vmem:[#allocation7 + $0x78] sm:$0xff]
        %v750 = vld [vmem:[#allocation7 + $0x80] sm:$0xff]
        %v751 = vld [vmem:[#allocation7 + $0x88] sm:$0xff]
        %v752 = vld [vmem:[#allocation7 + $0x90] sm:$0xff]
        %v753 = vld [vmem:[#allocation7 + $0x98] sm:$0xff]
        %v754 = vld [vmem:[#allocation7 + $0xa0] sm:$0xff]
        %v755 = vld [vmem:[#allocation7 + $0xa8] sm:$0xff]
        %v756 = vld [vmem:[#allocation7 + $0xb0] sm:$0xff]
        %v757 = vld [vmem:[#allocation7 + $0xb8] sm:$0xff]
        %v758 = vld [vmem:[#allocation7 + $0xc0] sm:$0xff]
        %v759 = vld [vmem:[#allocation7 + $0xc8] sm:$0xff]
        %v760 = vld [vmem:[#allocation7 + $0xd0] sm:$0xff]
        %v761 = vld [vmem:[#allocation7 + $0xd8] sm:$0xff]
        %v762 = vld [vmem:[#allocation7 + $0xe0] sm:$0xff]
        %v763 = vld [vmem:[#allocation7 + $0xe8] sm:$0xff]
        %v764 = vld [vmem:[#allocation7 + $0xf0] sm:$0xff]
        %v765 = vld [vmem:[#allocation7 + $0xf8] sm:$0xff]
        %v766 = vld [vmem:[#allocation7 + $0x100] sm:$0xff]
        %v767 = vld [vmem:[#allocation7 + $0x108] sm:$0xff]
        %v768 = vld [vmem:[#allocation7 + $0x110] sm:$0xff]
        %v769 = vld [vmem:[#allocation7 + $0x118] sm:$0xff]
        %v770 = vld [vmem:[#allocation7 + $0x120] sm:$0xff]
        %v771 = vld [vmem:[#allocation7 + $0x128] sm:$0xff]
        %v772 = vld [vmem:[#allocation7 + $0x130] sm:$0xff]
        %v773 = vld [vmem:[#allocation7 + $0x138] sm:$0xff]
        %v774 = vld [vmem:[#allocation7 + $0x140] sm:$0xff]
        %v775 = vld [vmem:[#allocation7 + $0x148] sm:$0xff]
        %v776 = vld [vmem:[#allocation7 + $0x150] sm:$0xff]
        %v777 = vld [vmem:[#allocation7 + $0x158] sm:$0xff]
        %v778 = vld [vmem:[#allocation7 + $0x160] sm:$0xff]
        %v779 = vld [vmem:[#allocation7 + $0x168] sm:$0xff]
        %v780 = vld [vmem:[#allocation7 + $0x170] sm:$0xff]
        %v781 = vld [vmem:[#allocation7 + $0x178] sm:$0xff]
        %v782 = vld [vmem:[#allocation7 + $0x180] sm:$0xff]
        %v783 = vld [vmem:[#allocation7 + $0x188] sm:$0xff]
        %v784 = vld [vmem:[#allocation7 + $0x190] sm:$0xff]
        %v785 = vld [vmem:[#allocation7 + $0x198] sm:$0xff]
        %v786 = vld [vmem:[#allocation7 + $0x1a0] sm:$0xff]
        %v787 = vld [vmem:[#allocation7 + $0x1a8] sm:$0xff]
        %v788 = vld [vmem:[#allocation7 + $0x1b0] sm:$0xff]
        %v789 = vld [vmem:[#allocation7 + $0x1b8] sm:$0xff]
        %v790 = vld [vmem:[#allocation7 + $0x1c0] sm:$0xff]
        %v791 = vld [vmem:[#allocation7 + $0x1c8] sm:$0xff]
        %v792 = vld [vmem:[#allocation7 + $0x1d0] sm:$0xff]
        %v793 = vld [vmem:[#allocation7 + $0x1d8] sm:$0xff]
        %v794 = vld [vmem:[#allocation7 + $0x1e0] sm:$0xff]
        %v795 = vld [vmem:[#allocation7 + $0x1e8] sm:$0xff]
        %v796 = vld [vmem:[#allocation7 + $0x1f0] sm:$0xff]
        %v797 = vld [vmem:[#allocation7 + $0x1f8] sm:$0xff]
        %798 = vmatprep.subr.mxu0 0.0
        %799 = vmatpush1.msra.mxu0 %v734
        %800 = vmatprep.subr.mxu0 0.0
        %801 = vmatpush1.msra.mxu0 %v735
        %802 = vmatprep.subr.mxu0 0.0
        %803 = vmatpush1.msra.mxu0 %v736
        %804 = vmatprep.subr.mxu0 0.0
        %805 = vmatpush1.msra.mxu0 %v737
        %806 = vmatprep.subr.mxu0 0.0
        %807 = vmatpush1.msra.mxu0 %v738
        %808 = vmatprep.subr.mxu0 0.0
        %809 = vmatpush1.msra.mxu0 %v739
        %810 = vmatprep.subr.mxu0 0.0
        %811 = vmatpush1.msra.mxu0 %v740
        %812 = vmatprep.subr.mxu0 0.0
        %813 = vmatpush1.msra.mxu0 %v741
        %814 = vmatprep.subr.mxu0 0.0
        %815 = vmatpush1.msra.mxu0 %v742
        %816 = vmatprep.subr.mxu0 0.0
        %817 = vmatpush1.msra.mxu0 %v743
        %818 = vmatprep.subr.mxu0 0.0
        %819 = vmatpush1.msra.mxu0 %v744
        %820 = vmatprep.subr.mxu0 0.0
        %821 = vmatpush1.msra.mxu0 %v745
        %822 = vmatprep.subr.mxu0 0.0
        %823 = vmatpush1.msra.mxu0 %v746
        %824 = vmatprep.subr.mxu0 0.0
        %825 = vmatpush1.msra.mxu0 %v747
        %826 = vmatprep.subr.mxu0 0.0
        %827 = vmatpush1.msra.mxu0 %v748
        %828 = vmatprep.subr.mxu0 0.0
        %829 = vmatpush1.msra.mxu0 %v749
        %830 = vmatprep.subr.mxu0 0.0
        %831 = vmatpush1.msra.mxu0 %v750
        %832 = vmatprep.subr.mxu0 0.0
        %833 = vmatpush1.msra.mxu0 %v751
        %834 = vmatprep.subr.mxu0 0.0
        %835 = vmatpush1.msra.mxu0 %v752
        %836 = vmatprep.subr.mxu0 0.0
        %837 = vmatpush1.msra.mxu0 %v753
        %838 = vmatprep.subr.mxu0 0.0
        %839 = vmatpush1.msra.mxu0 %v754
        %840 = vmatprep.subr.mxu0 0.0
        %841 = vmatpush1.msra.mxu0 %v755
        %842 = vmatprep.subr.mxu0 0.0
        %843 = vmatpush1.msra.mxu0 %v756
        %844 = vmatprep.subr.mxu0 0.0
        %845 = vmatpush1.msra.mxu0 %v757
        %846 = vmatprep.subr.mxu0 0.0
        %847 = vmatpush1.msra.mxu0 %v758
        %848 = vmatprep.subr.mxu0 0.0
        %849 = vmatpush1.msra.mxu0 %v759
        %850 = vmatprep.subr.mxu0 0.0
        %851 = vmatpush1.msra.mxu0 %v760
        %852 = vmatprep.subr.mxu0 0.0
        %853 = vmatpush1.msra.mxu0 %v761
        %854 = vmatprep.subr.mxu0 0.0
        %855 = vmatpush1.msra.mxu0 %v762
        %856 = vmatprep.subr.mxu0 0.0
        %857 = vmatpush1.msra.mxu0 %v763
        %858 = vmatprep.subr.mxu0 0.0
        %859 = vmatpush1.msra.mxu0 %v764
        %860 = vmatprep.subr.mxu0 0.0
        %861 = vmatpush1.msra.mxu0 %v765
        %862 = vmatprep.mubr.f32.mxu0 %v731
        %863 = vmatmul.mubr.f32.gmra.mrb[0].mxu0 %v730
        %v864 = vpop.f32.mrb[0].mxu0
        %v865 = vadd.f32 %v294, %v864
        %v866 = vpop.f32.mrb[0].mxu0
        %867 = vdwg.mxu0
        %868 = vmatprep.subr.mxu0 0.0
        %869 = vmatpush1.msra.mxu0 %v766
        %870 = vmatprep.subr.mxu0 0.0
        %871 = vmatpush1.msra.mxu0 %v767
        %872 = vmatprep.subr.mxu0 0.0
        %873 = vmatpush1.msra.mxu0 %v768
        %874 = vmatprep.subr.mxu0 0.0
        %875 = vmatpush1.msra.mxu0 %v769
        %876 = vmatprep.subr.mxu0 0.0
        %877 = vmatpush1.msra.mxu0 %v770
        %878 = vmatprep.subr.mxu0 0.0
        %879 = vmatpush1.msra.mxu0 %v771
        %880 = vmatprep.subr.mxu0 0.0
        %881 = vmatpush1.msra.mxu0 %v772
        %882 = vmatprep.subr.mxu0 0.0
        %883 = vmatpush1.msra.mxu0 %v773
        %884 = vmatprep.subr.mxu0 0.0
        %885 = vmatpush1.msra.mxu0 %v774
        %886 = vmatprep.subr.mxu0 0.0
        %887 = vmatpush1.msra.mxu0 %v775
        %888 = vmatprep.subr.mxu0 0.0
        %889 = vmatpush1.msra.mxu0 %v776
        %890 = vmatprep.subr.mxu0 0.0
        %891 = vmatpush1.msra.mxu0 %v777
        %892 = vmatprep.subr.mxu0 0.0
        %893 = vmatpush1.msra.mxu0 %v778
        %894 = vmatprep.subr.mxu0 0.0
        %895 = vmatpush1.msra.mxu0 %v779
        %896 = vmatprep.subr.mxu0 0.0
        %897 = vmatpush1.msra.mxu0 %v780
        %898 = vmatprep.subr.mxu0 0.0
        %899 = vmatpush1.msra.mxu0 %v781
        %900 = vmatprep.subr.mxu0 0.0
        %901 = vmatpush1.msra.mxu0 %v782
        %902 = vmatprep.subr.mxu0 0.0
        %903 = vmatpush1.msra.mxu0 %v783
        %904 = vmatprep.subr.mxu0 0.0
        %905 = vmatpush1.msra.mxu0 %v784
        %906 = vmatprep.subr.mxu0 0.0
        %907 = vmatpush1.msra.mxu0 %v785
        %908 = vmatprep.subr.mxu0 0.0
        %909 = vmatpush1.msra.mxu0 %v786
        %910 = vmatprep.subr.mxu0 0.0
        %911 = vmatpush1.msra.mxu0 %v787
        %912 = vmatprep.subr.mxu0 0.0
        %913 = vmatpush1.msra.mxu0 %v788
        %914 = vmatprep.subr.mxu0 0.0
        %915 = vmatpush1.msra.mxu0 %v789
        %916 = vmatprep.subr.mxu0 0.0
        %917 = vmatpush1.msra.mxu0 %v790
        %918 = vmatprep.subr.mxu0 0.0
        %919 = vmatpush1.msra.mxu0 %v791
        %920 = vmatprep.subr.mxu0 0.0
        %921 = vmatpush1.msra.mxu0 %v792
        %922 = vmatprep.subr.mxu0 0.0
        %923 = vmatpush1.msra.mxu0 %v793
        %924 = vmatprep.subr.mxu0 0.0
        %925 = vmatpush1.msra.mxu0 %v794
        %926 = vmatprep.subr.mxu0 0.0
        %927 = vmatpush1.msra.mxu0 %v795
        %928 = vmatprep.subr.mxu0 0.0
        %929 = vmatpush1.msra.mxu0 %v796
        %930 = vmatprep.subr.mxu0 0.0
        %931 = vmatpush1.msra.mxu0 %v797
        %932 = vmatprep.mubr.f32.mxu0 %v733
        %933 = vmatmul.mubr.f32.gmra.mrb[0].mxu0 %v732
        %v934 = vpop.f32.mrb[0].mxu0
        %v935 = vadd.f32 %v865, %v934
        %v936 = vpop.f32.mrb[0].mxu0
        %937 = vdwg.mxu0
        %v938 = vmul.f32 %v935, %v285
        %v939 = vadd.f32 %v938, %v273
        %940 = vst [vmem:[%s268] sm:$0xff] %v939
        %s941 = sand.u32 %s141, 1
        %s942 = scalar_lea.sflag [#allocation4], %s941
        %s943 = sand.u32 %s141, 1
        %s944 = smul.addr %s943, 8
        %s945 = scalar_lea.vmem [#allocation8], %s944
        // Predicated region
        $region53: #{tpu_custom_call.1} parent=39 // pred_check
          %p946 = pneg %p151
        $region54: #{tpu_custom_call.1} parent=39 // pred_check_branch
          %948 = sbr.rel (%p946) target = $region56
        $region55: #{tpu_custom_call.1} parent=39 // pred_region
          %s950 = ssub.s32 128, 128
          %951 = vsyncadd %s942, %s950
          %s952 = smul.addr %s23, 128
          %s953 = scalar_lea.hbm %s5, %s952
          %s955 = sshll.u32 %s945, 4
          %s956 = int_to_ptr.vmem [resolvable:$true] %s955
          %958 = dma.vmem_to_hbm [thread:$0]  %s956, 128, %s953, %s942
        $region56: #{tpu_custom_call.1} parent=39 // pred_fallthru
          _
      $region40: #{tpu_custom_call.1} parent=5 // pred_fallthru
        _
      %p959 = scmp.le.s32.totalorder 2, %s18
      // Predicated region
      $region57: #{tpu_custom_call.1} parent=5 // pred_check
        %p960 = pneg %p959
      $region58: #{tpu_custom_call.1} parent=5 // pred_check_branch
        %962 = sbr.rel (%p960) target = $region60
      $region59: #{tpu_custom_call.1} parent=5 // pred_region
        %s963 = ssub.s32 %s18, 2
        // Predicated region
        $region61: #{tpu_custom_call.1} parent=59 // pred_check
          %p964 = pneg %p157
        $region62: #{tpu_custom_call.1} parent=59 // pred_check_branch
          %966 = sbr.rel (%p964) target = $region64
        $region63: #{tpu_custom_call.1} parent=59 // pred_region
          %s967 = sand.u32 %s142, 1
          %s968 = scalar_lea.sflag [#allocation4], %s967
          %s969 = sand.u32 %s142, 1
          %s970 = smul.addr %s969, 8
          %s971 = scalar_lea.vmem [#allocation8], %s970
          %972 = dma.done %s968, 128
        $region64: #{tpu_custom_call.1} parent=59 // pred_fallthru
          _
      $region60: #{tpu_custom_call.1} parent=5 // pred_fallthru
        _
    $region6: #{tpu_custom_call.1} parent=1 // loop_footer
      %s22 = sadd.s32 1, %s18
    $region7: #{tpu_custom_call.1} parent=1 // loop_footer_branch
      %17 = sbr.rel target = $region3
    $region8: #{tpu_custom_call.1} parent=1 // loop_exit
      _
    %973 = vsyncpa [#allocation3], 1
    %s974 = scalar_lea.sflag [#allocation3], 1
    %975 = vsyncpa %s974, 1
    %976 = vsyncpa [#allocation6], 1
    %977 = vsyncpa [#allocation4], 1
    %s978 = scalar_lea.sflag [#allocation4], 1
    %979 = vsyncpa %s978, 1

// kernel: tpu_custom_call.1
$region0: #{tpu_custom_call.1}
  #allocation0 [shape = 'u32[]', space=smem, size = 0x4, offset = 0x4, fixed_abs, tag = 'smem constant byte address 0x4 - core index']
  #allocation1 [shape = 'u32[144,128]{1,0:T(1,128)}', space=vmem, size = 0x12000, scoped, tag = 'internal scratch']
  %s0 = inlined_call_operand.hbm [shape: f32[16,128], index: 0, kind: input, shape index: {}]
  %s1 = inlined_call_operand.hbm [shape: f32[128,512], index: 1, kind: input, shape index: {}]
  %s2 = inlined_call_operand.hbm [shape: f32[512,128], index: 2, kind: input, shape index: {}]
  %s3 = inlined_call_operand.vmem [shape: f32[1,512], index: 3, kind: input, shape index: {}]
  %s4 = inlined_call_operand.vmem [shape: f32[1,128], index: 4, kind: input, shape index: {}]
  %s5 = inlined_call_operand.hbm [shape: f32[16,128], index: 5, kind: output, shape index: {}]
  %s6 = sld [smem:[#allocation0]]
  $region65: #{tpu_custom_call.1} parent=0
    _
  %s8 = ssub.s32 1, %s6
  %s9 = scalar_select 0, %s8, %s6
  $region1: #{tpu_custom_call.1} parent=0
    #allocation2 [shape = 'u8[8192]{0}', space=vmem, size = 0x2000, scoped, tag = 'input window, operand 0']
    #allocation3 [shape = 's32[2]{0}', space=sflag, size = 0x8, scoped, tag = 'scoped memory for tpu_custom_call.1']
    #allocation4 [shape = 's32[2]{0}', space=sflag, size = 0x8, scoped, tag = 'scoped memory for tpu_custom_call.1']
    #allocation5 [shape = 'u8[262144]{0}', space=vmem, size = 0x40000, scoped, tag = 'input window, operand 1, single buffered']
    #allocation6 [shape = 's32[1]{0}', space=sflag, size = 0x4, scoped, tag = 'scoped memory for tpu_custom_call.1']
    #allocation7 [shape = 'u8[262144]{0}', space=vmem, size = 0x40000, scoped, tag = 'input window, operand 2, single buffered']
    #allocation8 [shape = 'u8[8192]{0}', space=vmem, size = 0x2000, scoped, tag = 'output window, operand 0']
    %10 = vsyncpa [#allocation3], 0
    %s11 = scalar_lea.sflag [#allocation3], 1
    %12 = vsyncpa %s11, 0
    %13 = vsyncpa [#allocation6], 0
    %14 = vsyncpa [#allocation4], 0
    %s15 = scalar_lea.sflag [#allocation4], 1
    %16 = vsyncpa %s15, 0
    loop: start=0, step=1, limit=4
    $region2: #{tpu_custom_call.1} parent=1 // loop_pre_header
      _
    $region3: #{tpu_custom_call.1} parent=1 // loop_header
      %s18 = sphi 0, %s22
      %p19 = scmp.ge.s32.totalorder %s18, 4
      %s28 = sphi 0, %s30
      %s31 = sphi 0, %s28
      %s32 = sphi 0, %s31
      %s48 = sphi 0, %s32
      %s52 = sphi 0, %s52
      %s54 = sphi 0, %s52
      %s55 = sphi 0, %s54
      %s69 = sphi 0, %s55
      %s73 = sphi 0, %s73
      %s75 = sphi 0, %s73
      %s76 = sphi 0, %s75
      %s90 = sphi 0, %s76
      %s94 = sphi 0, %s94
      %s96 = sphi 0, %s94
      %s97 = sphi 0, %s96
      %s111 = sphi 0, %s97
      %s115 = sphi 0, %s115
      %s117 = sphi 0, %s115
      %s118 = sphi 0, %s117
      %s132 = sphi 0, %s118
      %s138 = sphi 0, %s140
      %s141 = sphi 0, %s138
      %s142 = sphi 0, %s141
      %s158 = sphi 0, %s142
    $region4: #{tpu_custom_call.1} parent=1 // loop_header_branch
      %21 = sbr.rel (%p19) target = $region8
    $region5: #{tpu_custom_call.1} parent=1 // loop_body
      %s23 = ssub.s32 %s18, 1
      %s24 = ssub.s32 %s18, 2
      %s25 = sadd.s32 %s18, 1
      %s26 = ssub.s32 %s18, %s25
      %p27 = scmp.eq.s32.totalorder %s26, 0
      %s29 = sadd.s32 %s28, 1
      %s30 = scalar_select %p27, %s28, %s29
      %p33 = pneg %p27
      %p34 = scmp.eq.s32.totalorder %s18, 1
      %p35 = por %p33, %p34
      %p36 = scmp.ne.s32.totalorder %s28, %s31
      %p37 = scmp.eq.s32.totalorder %s18, 0
      %p38 = por %p36, %p37
      %p39 = scmp.ne.s32.totalorder %s28, %s31
      %p40 = scmp.eq.s32.totalorder %s23, 1
      %p41 = por %p39, %p40
      %p42 = scmp.ne.s32.totalorder %s31, %s32
      %p43 = scmp.eq.s32.totalorder %s23, 0
      %p44 = por %p42, %p43
      %p45 = scmp.ne.s32.totalorder %s31, %s32
      %p46 = scmp.eq.s32.totalorder %s24, 1
      %p47 = por %p45, %p46
      %p49 = scmp.ne.s32.totalorder %s32, %s48
      %p50 = scmp.eq.s32.totalorder %s24, 0
      %p51 = por %p49, %p50
      %s53 = sadd.s32 %s52, 1
      %p56 = scmp.eq.s32.totalorder %s18, 1
      %p57 = scmp.ne.s32.totalorder %s52, %s54
      %p58 = scmp.eq.s32.totalorder %s18, 0
      %p59 = por %p57, %p58
      %p60 = scmp.ne.s32.totalorder %s52, %s54
      %p61 = scmp.eq.s32.totalorder %s23, 1
      %p62 = por %p60, %p61
      %p63 = scmp.ne.s32.totalorder %s54, %s55
      %p64 = scmp.eq.s32.totalorder %s23, 0
      %p65 = por %p63, %p64
      %p66 = scmp.ne.s32.totalorder %s54, %s55
      %p67 = scmp.eq.s32.totalorder %s24, 1
      %p68 = por %p66, %p67
      %p70 = scmp.ne.s32.totalorder %s55, %s69
      %p71 = scmp.eq.s32.totalorder %s24, 0
      %p72 = por %p70, %p71
      %s74 = sadd.s32 %s73, 1
      %p77 = scmp.eq.s32.totalorder %s18, 1
      %p78 = scmp.ne.s32.totalorder %s73, %s75
      %p79 = scmp.eq.s32.totalorder %s18, 0
      %p80 = por %p78, %p79
      %p81 = scmp.ne.s32.totalorder %s73, %s75
      %p82 = scmp.eq.s32.totalorder %s23, 1
      %p83 = por %p81, %p82
      %p84 = scmp.ne.s32.totalorder %s75, %s76
      %p85 = scmp.eq.s32.totalorder %s23, 0
      %p86 = por %p84, %p85
      %p87 = scmp.ne.s32.totalorder %s75, %s76
      %p88 = scmp.eq.s32.totalorder %s24, 1
      %p89 = por %p87, %p88
      %p91 = scmp.ne.s32.totalorder %s76, %s90
      %p92 = scmp.eq.s32.totalorder %s24, 0
      %p93 = por %p91, %p92
      %s95 = sadd.s32 %s94, 1
      %p98 = scmp.eq.s32.totalorder %s18, 1
      %p99 = scmp.ne.s32.totalorder %s94, %s96
      %p100 = scmp.eq.s32.totalorder %s18, 0
      %p101 = por %p99, %p100
      %p102 = scmp.ne.s32.totalorder %s94, %s96
      %p103 = scmp.eq.s32.totalorder %s23, 1
      %p104 = por %p102, %p103
      %p105 = scmp.ne.s32.totalorder %s96, %s97
      %p106 = scmp.eq.s32.totalorder %s23, 0
      %p107 = por %p105, %p106
      %p108 = scmp.ne.s32.totalorder %s96, %s97
      %p109 = scmp.eq.s32.totalorder %s24, 1
      %p110 = por %p108, %p109
      %p112 = scmp.ne.s32.totalorder %s97, %s111
      %p113 = scmp.eq.s32.totalorder %s24, 0
      %p114 = por %p112, %p113
      %s116 = sadd.s32 %s115, 1
      %p119 = scmp.eq.s32.totalorder %s18, 1
      %p120 = scmp.ne.s32.totalorder %s115, %s117
      %p121 = scmp.eq.s32.totalorder %s18, 0
      %p122 = por %p120, %p121
      %p123 = scmp.ne.s32.totalorder %s115, %s117
      %p124 = scmp.eq.s32.totalorder %s23, 1
      %p125 = por %p123, %p124
      %p126 = scmp.ne.s32.totalorder %s117, %s118
      %p127 = scmp.eq.s32.totalorder %s23, 0
      %p128 = por %p126, %p127
      %p129 = scmp.ne.s32.totalorder %s117, %s118
      %p130 = scmp.eq.s32.totalorder %s24, 1
      %p131 = por %p129, %p130
      %p133 = scmp.ne.s32.totalorder %s118, %s132
      %p134 = scmp.eq.s32.totalorder %s24, 0
      %p135 = por %p133, %p134
      %s136 = ssub.s32 %s18, %s25
      %p137 = scmp.eq.s32.totalorder %s136, 0
      %s139 = sadd.s32 %s138, 1
      %s140 = scalar_select %p137, %s138, %s139
      %p143 = pneg %p137
      %p144 = scmp.eq.s32.totalorder %s18, 1
      %p145 = por %p143, %p144
      %p146 = scmp.ne.s32.totalorder %s138, %s141
      %p147 = scmp.eq.s32.totalorder %s18, 0
      %p148 = por %p146, %p147
      %p149 = scmp.ne.s32.totalorder %s138, %s141
      %p150 = scmp.eq.s32.totalorder %s23, 1
      %p151 = por %p149, %p150
      %p152 = scmp.ne.s32.totalorder %s141, %s142
      %p153 = scmp.eq.s32.totalorder %s23, 0
      %p154 = por %p152, %p153
      %p155 = scmp.ne.s32.totalorder %s141, %s142
      %p156 = scmp.eq.s32.totalorder %s24, 1
      %p157 = por %p155, %p156
      %p159 = scmp.ne.s32.totalorder %s142, %s158
      %p160 = scmp.eq.s32.totalorder %s24, 0
      %p161 = por %p159, %p160
      %p162 = scmp.le.s32.totalorder 1, %s18
      %p163 = scmp.lt.s32.totalorder %s18, 3
      %p164 = pnand %p162, %p163
      %p165 = pneg %p164
      // Predicated region
      $region9: #{tpu_custom_call.1} parent=5 // pred_check
        _
      $region10: #{tpu_custom_call.1} parent=5 // pred_check_branch
        %167 = sbr.rel (%p164) target = $region12
      $region11: #{tpu_custom_call.1} parent=5 // pred_region
        %s168 = ssub.s32 %s18, 1
        // Predicated region
        $region13: #{tpu_custom_call.1} parent=11 // pred_check
          %p169 = pneg %p65
        $region14: #{tpu_custom_call.1} parent=11 // pred_check_branch
          %171 = sbr.rel (%p169) target = $region16
        $region15: #{tpu_custom_call.1} parent=11 // pred_region
          %s173 = ssub.s32 8192, 8192
          %174 = vsyncadd [#allocation6], %s173
          %s175 = sshll.u32 [#allocation5], 4
          %s176 = int_to_ptr.vmem [resolvable:$true] %s175
          %181 = dma.hbm_to_vmem [thread:$0]  %s1, 8192, %s176, [#allocation6], 512, 512, 32
        $region16: #{tpu_custom_call.1} parent=11 // pred_fallthru
          _
        // Predicated region
        $region17: #{tpu_custom_call.1} parent=11 // pred_check
          %p182 = pneg %p86
        $region18: #{tpu_custom_call.1} parent=11 // pred_check_branch
          %184 = sbr.rel (%p182) target = $region20
        $region19: #{tpu_custom_call.1} parent=11 // pred_region
          %s186 = ssub.s32 8192, 8192
          %187 = vsyncadd [#allocation6], %s186
          %s188 = sshll.u32 [#allocation7], 4
          %s189 = int_to_ptr.vmem [resolvable:$true] %s188
          %194 = dma.hbm_to_vmem [thread:$0]  %s2, 8192, %s189, [#allocation6], 128, 128, 8
        $region20: #{tpu_custom_call.1} parent=11 // pred_fallthru
          _
        // Predicated region
        $region21: #{tpu_custom_call.1} parent=11 // pred_check
          %p195 = pneg %p107
        $region22: #{tpu_custom_call.1} parent=11 // pred_check_branch
          %197 = sbr.rel (%p195) target = $region24
        $region23: #{tpu_custom_call.1} parent=11 // pred_region
          _
        $region24: #{tpu_custom_call.1} parent=11 // pred_fallthru
          _
        // Predicated region
        $region25: #{tpu_custom_call.1} parent=11 // pred_check
          %p198 = pneg %p128
        $region26: #{tpu_custom_call.1} parent=11 // pred_check_branch
          %200 = sbr.rel (%p198) target = $region28
        $region27: #{tpu_custom_call.1} parent=11 // pred_region
          _
        $region28: #{tpu_custom_call.1} parent=11 // pred_fallthru
          _
      $region12: #{tpu_custom_call.1} parent=5 // pred_fallthru
        _
      %p201 = scmp.lt.s32.totalorder %s18, 2
      // Predicated region
      $region29: #{tpu_custom_call.1} parent=5 // pred_check
        %p202 = pneg %p201
      $region30: #{tpu_custom_call.1} parent=5 // pred_check_branch
        %204 = sbr.rel (%p202) target = $region32
      $region31: #{tpu_custom_call.1} parent=5 // pred_region
        // Predicated region
        $region33: #{tpu_custom_call.1} parent=31 // pred_check
          %p205 = pneg %p38
        $region34: #{tpu_custom_call.1} parent=31 // pred_check_branch
          %207 = sbr.rel (%p205) target = $region36
        $region35: #{tpu_custom_call.1} parent=31 // pred_region
          %s208 = sand.u32 %s28, 1
          %s209 = scalar_lea.sflag [#allocation3], %s208
          %s210 = sand.u32 %s28, 1
          %s211 = smul.addr %s210, 8
          %s212 = scalar_lea.vmem [#allocation2], %s211
          %s214 = ssub.s32 128, 128
          %215 = vsyncadd %s209, %s214
          %s216 = smul.addr %s18, 128
          %s217 = scalar_lea.hbm %s0, %s216
          %s219 = sshll.u32 %s212, 4
          %s220 = int_to_ptr.vmem [resolvable:$true] %s219
          %222 = dma.hbm_to_vmem [thread:$0]  %s217, 128, %s220, %s209
        $region36: #{tpu_custom_call.1} parent=31 // pred_fallthru
          _
      $region32: #{tpu_custom_call.1} parent=5 // pred_fallthru
        _
      %p223 = scmp.le.s32.totalorder 1, %s18
      %p224 = scmp.lt.s32.totalorder %s18, 3
      %p225 = pnand %p223, %p224
      %p226 = pneg %p225
      // Predicated region
      $region37: #{tpu_custom_call.1} parent=5 // pred_check
        _
      $region38: #{tpu_custom_call.1} parent=5 // pred_check_branch
        %228 = sbr.rel (%p225) target = $region40
      $region39: #{tpu_custom_call.1} parent=5 // pred_region
        %s229 = ssub.s32 %s18, 1
        %s230 = sand.u32 %s31, 1
        %s231 = scalar_lea.sflag [#allocation3], %s230
        %s232 = sand.u32 %s31, 1
        %s233 = smul.addr %s232, 8
        %s234 = scalar_lea.vmem [#allocation2], %s233
        // Predicated region
        $region41: #{tpu_custom_call.1} parent=39 // pred_check
          %p235 = pneg %p44
        $region42: #{tpu_custom_call.1} parent=39 // pred_check_branch
          %237 = sbr.rel (%p235) target = $region44
        $region43: #{tpu_custom_call.1} parent=39 // pred_region
          %238 = dma.done %s231, 128
        $region44: #{tpu_custom_call.1} parent=39 // pred_fallthru
          _
        // Predicated region
        $region45: #{tpu_custom_call.1} parent=39 // pred_check
          %p239 = pneg %p65
        $region46: #{tpu_custom_call.1} parent=39 // pred_check_branch
          %241 = sbr.rel (%p239) target = $region48
        $region47: #{tpu_custom_call.1} parent=39 // pred_region
          %242 = dma.done [#allocation6], 8192
        $region48: #{tpu_custom_call.1} parent=39 // pred_fallthru
          _
        // Predicated region
        $region49: #{tpu_custom_call.1} parent=39 // pred_check
          %p243 = pneg %p86
        $region50: #{tpu_custom_call.1} parent=39 // pred_check_branch
          %245 = sbr.rel (%p243) target = $region52
        $region51: #{tpu_custom_call.1} parent=39 // pred_region
          %246 = dma.done [#allocation6], 8192
        $region52: #{tpu_custom_call.1} parent=39 // pred_fallthru
          _
        %s247 = sand.u32 %s31, 1
        %s248 = scalar_lea.sflag [#allocation3], %s247
        %s249 = sand.u32 %s31, 1
        %s250 = smul.addr %s249, 8
        %s251 = scalar_lea.vmem [#allocation2], %s250
        %p252 = pneg %p44
        %p253 = pneg %p41
        %p254 = pneg %p65
        %p255 = pneg %p62
        %p256 = pneg %p86
        %p257 = pneg %p83
        %p258 = pneg %p107
        %p259 = pneg %p104
        %p260 = pneg %p128
        %p261 = pneg %p125
        %p262 = pneg %p154
        %p263 = pneg %p151
        %s264 = sand.u32 %s141, 1
        %s265 = scalar_lea.sflag [#allocation4], %s264
        %s266 = sand.u32 %s141, 1
        %s267 = smul.addr %s266, 8
        %s268 = scalar_lea.vmem [#allocation8], %s267
        %v269 = vld [vmem:[%s234] sm:$0xff]
        %270 = vadd.xlane.f32.xlu0 %v269
        %v271 = vpop.xlane.xlu0 %270
        %v272 = vrcp.pop 128.0
        %v273 = vmul.f32 %v271, %v272
        %v274 = vsub.f32 %v269, %v273
        %v275 = vmul.f32 %v274, %v274
        %276 = vadd.xlane.f32.xlu0 %v275
        %v277 = vpop.xlane.xlu0 %276
        %v278 = vmul.f32 %v277, 0.007874016
        %v279 = vrsqrt.pop %v278
        %v280 = vmul.f32 %v278, %v279
        %vm281 = vcmp.eq.f32.partialorder %v278, inf
        %v282 = vsel %vm281, %v278, %v280
        %vm283 = vcmp.eq.f32.partialorder %v278, 0.0
        %v284 = vand.u32 %v278, 2147483648
        %v285 = vsel %vm283, %v284, %v282
        %v286 = vadd.f32 %v285, 1e-05
        %v287 = vrcp.pop %v286
        %v288 = vld [vmem:[%s4] sm:$0x1]
        %v289 = vmul.f32 %v274, %v287
        %v291 = vlaneseq
        %v292 = vshrl.u32 %v291, 7
        %v293 = vsub.s32 0, %v292
        %v294 = vrot.slane %v288, %v293
        %v296 = vsub.f32 %v289, %v294
        %v297 = vld [vmem:[#allocation5] sm:$0xff]
        %v298 = vld [vmem:[#allocation5 + $0x8] sm:$0xff]
        %v299 = vld [vmem:[#allocation5 + $0x10] sm:$0xff]
        %v300 = vld [vmem:[#allocation5 + $0x18] sm:$0xff]
        %v301 = vld [vmem:[#allocation5 + $0x20] sm:$0xff]
        %v302 = vld [vmem:[#allocation5 + $0x28] sm:$0xff]
        %v303 = vld [vmem:[#allocation5 + $0x30] sm:$0xff]
        %v304 = vld [vmem:[#allocation5 + $0x38] sm:$0xff]
        %v305 = vld [vmem:[#allocation5 + $0x40] sm:$0xff]
        %v306 = vld [vmem:[#allocation5 + $0x48] sm:$0xff]
        %v307 = vld [vmem:[#allocation5 + $0x50] sm:$0xff]
        %v308 = vld [vmem:[#allocation5 + $0x58] sm:$0xff]
        %v309 = vld [vmem:[#allocation5 + $0x60] sm:$0xff]
        %v310 = vld [vmem:[#allocation5 + $0x68] sm:$0xff]
        %v311 = vld [vmem:[#allocation5 + $0x70] sm:$0xff]
        %v312 = vld [vmem:[#allocation5 + $0x78] sm:$0xff]
        %v313 = vld [vmem:[#allocation5 + $0x80] sm:$0xff]
        %v314 = vld [vmem:[#allocation5 + $0x88] sm:$0xff]
        %v315 = vld [vmem:[#allocation5 + $0x90] sm:$0xff]
        %v316 = vld [vmem:[#allocation5 + $0x98] sm:$0xff]
        %v317 = vld [vmem:[#allocation5 + $0xa0] sm:$0xff]
        %v318 = vld [vmem:[#allocation5 + $0xa8] sm:$0xff]
        %v319 = vld [vmem:[#allocation5 + $0xb0] sm:$0xff]
        %v320 = vld [vmem:[#allocation5 + $0xb8] sm:$0xff]
        %v321 = vld [vmem:[#allocation5 + $0xc0] sm:$0xff]
        %v322 = vld [vmem:[#allocation5 + $0xc8] sm:$0xff]
        %v323 = vld [vmem:[#allocation5 + $0xd0] sm:$0xff]
        %v324 = vld [vmem:[#allocation5 + $0xd8] sm:$0xff]
        %v325 = vld [vmem:[#allocation5 + $0xe0] sm:$0xff]
        %v326 = vld [vmem:[#allocation5 + $0xe8] sm:$0xff]
        %v327 = vld [vmem:[#allocation5 + $0xf0] sm:$0xff]
        %v328 = vld [vmem:[#allocation5 + $0xf8] sm:$0xff]
        %v329 = vld [vmem:[#allocation5 + $0x100] sm:$0xff]
        %v330 = vld [vmem:[#allocation5 + $0x108] sm:$0xff]
        %v331 = vld [vmem:[#allocation5 + $0x110] sm:$0xff]
        %v332 = vld [vmem:[#allocation5 + $0x118] sm:$0xff]
        %v333 = vld [vmem:[#allocation5 + $0x120] sm:$0xff]
        %v334 = vld [vmem:[#allocation5 + $0x128] sm:$0xff]
        %v335 = vld [vmem:[#allocation5 + $0x130] sm:$0xff]
        %v336 = vld [vmem:[#allocation5 + $0x138] sm:$0xff]
        %v337 = vld [vmem:[#allocation5 + $0x140] sm:$0xff]
        %v338 = vld [vmem:[#allocation5 + $0x148] sm:$0xff]
        %v339 = vld [vmem:[#allocation5 + $0x150] sm:$0xff]
        %v340 = vld [vmem:[#allocation5 + $0x158] sm:$0xff]
        %v341 = vld [vmem:[#allocation5 + $0x160] sm:$0xff]
        %v342 = vld [vmem:[#allocation5 + $0x168] sm:$0xff]
        %v343 = vld [vmem:[#allocation5 + $0x170] sm:$0xff]
        %v344 = vld [vmem:[#allocation5 + $0x178] sm:$0xff]
        %v345 = vld [vmem:[#allocation5 + $0x180] sm:$0xff]
        %v346 = vld [vmem:[#allocation5 + $0x188] sm:$0xff]
        %v347 = vld [vmem:[#allocation5 + $0x190] sm:$0xff]
        %v348 = vld [vmem:[#allocation5 + $0x198] sm:$0xff]
        %v349 = vld [vmem:[#allocation5 + $0x1a0] sm:$0xff]
        %v350 = vld [vmem:[#allocation5 + $0x1a8] sm:$0xff]
        %v351 = vld [vmem:[#allocation5 + $0x1b0] sm:$0xff]
        %v352 = vld [vmem:[#allocation5 + $0x1b8] sm:$0xff]
        %v353 = vld [vmem:[#allocation5 + $0x1c0] sm:$0xff]
        %v354 = vld [vmem:[#allocation5 + $0x1c8] sm:$0xff]
        %v355 = vld [vmem:[#allocation5 + $0x1d0] sm:$0xff]
        %v356 = vld [vmem:[#allocation5 + $0x1d8] sm:$0xff]
        %v357 = vld [vmem:[#allocation5 + $0x1e0] sm:$0xff]
        %v358 = vld [vmem:[#allocation5 + $0x1e8] sm:$0xff]
        %v359 = vld [vmem:[#allocation5 + $0x1f0] sm:$0xff]
        %v360 = vld [vmem:[#allocation5 + $0x1f8] sm:$0xff]
        %v361 = vld [vmem:[%s3] sm:$0xf]
        %v363 = vlaneseq
        %v364 = vshrl.u32 %v363, 7
        %v365 = vsub.s32 0, %v364
        %v366 = vrot.slane %v361, %v365
        %v367 = vlaneseq
        %v368 = vshrl.u32 %v367, 7
        %v369 = vsub.s32 1, %v368
        %v370 = vrot.slane %v361, %v369
        %v371 = vlaneseq
        %v372 = vshrl.u32 %v371, 7
        %v373 = vsub.s32 2, %v372
        %v374 = vrot.slane %v361, %v373
        %v375 = vlaneseq
        %v376 = vshrl.u32 %v375, 7
        %v377 = vsub.s32 3, %v376
        %v378 = vrot.slane %v361, %v377
        %383 = vmatprep.subr.mxu0 %v298
        %384 = vmatpush1.msra.mxu0 %v297
        %385 = vmatprep.subr.mxu0 %v302
        %386 = vmatpush1.msra.mxu0 %v301
        %387 = vmatprep.subr.mxu0 %v306
        %388 = vmatpush1.msra.mxu0 %v305
        %389 = vmatprep.subr.mxu0 %v310
        %390 = vmatpush1.msra.mxu0 %v309
        %391 = vmatprep.subr.mxu0 %v314
        %392 = vmatpush1.msra.mxu0 %v313
        %393 = vmatprep.subr.mxu0 %v318
        %394 = vmatpush1.msra.mxu0 %v317
        %395 = vmatprep.subr.mxu0 %v322
        %396 = vmatpush1.msra.mxu0 %v321
        %397 = vmatprep.subr.mxu0 %v326
        %398 = vmatpush1.msra.mxu0 %v325
        %399 = vmatprep.subr.mxu0 %v330
        %400 = vmatpush1.msra.mxu0 %v329
        %401 = vmatprep.subr.mxu0 %v334
        %402 = vmatpush1.msra.mxu0 %v333
        %403 = vmatprep.subr.mxu0 %v338
        %404 = vmatpush1.msra.mxu0 %v337
        %405 = vmatprep.subr.mxu0 %v342
        %406 = vmatpush1.msra.mxu0 %v341
        %407 = vmatprep.subr.mxu0 %v346
        %408 = vmatpush1.msra.mxu0 %v345
        %409 = vmatprep.subr.mxu0 %v350
        %410 = vmatpush1.msra.mxu0 %v349
        %411 = vmatprep.subr.mxu0 %v354
        %412 = vmatpush1.msra.mxu0 %v353
        %413 = vmatprep.subr.mxu0 %v358
        %414 = vmatpush1.msra.mxu0 %v357
        %415 = vmatprep.subr.mxu0 0.0
        %416 = vmatpush1.msra.mxu0 0.0
        %417 = vmatprep.subr.mxu0 0.0
        %418 = vmatpush1.msra.mxu0 0.0
        %419 = vmatprep.subr.mxu0 0.0
        %420 = vmatpush1.msra.mxu0 0.0
        %421 = vmatprep.subr.mxu0 0.0
        %422 = vmatpush1.msra.mxu0 0.0
        %423 = vmatprep.subr.mxu0 0.0
        %424 = vmatpush1.msra.mxu0 0.0
        %425 = vmatprep.subr.mxu0 0.0
        %426 = vmatpush1.msra.mxu0 0.0
        %427 = vmatprep.subr.mxu0 0.0
        %428 = vmatpush1.msra.mxu0 0.0
        %429 = vmatprep.subr.mxu0 0.0
        %430 = vmatpush1.msra.mxu0 0.0
        %431 = vmatprep.subr.mxu0 0.0
        %432 = vmatpush1.msra.mxu0 0.0
        %433 = vmatprep.subr.mxu0 0.0
        %434 = vmatpush1.msra.mxu0 0.0
        %435 = vmatprep.subr.mxu0 0.0
        %436 = vmatpush1.msra.mxu0 0.0
        %437 = vmatprep.subr.mxu0 0.0
        %438 = vmatpush1.msra.mxu0 0.0
        %439 = vmatprep.subr.mxu0 0.0
        %440 = vmatpush1.msra.mxu0 0.0
        %441 = vmatprep.subr.mxu0 0.0
        %442 = vmatpush1.msra.mxu0 0.0
        %443 = vmatprep.subr.mxu0 0.0
        %444 = vmatpush1.msra.mxu0 0.0
        %445 = vmatprep.subr.mxu0 0.0
        %446 = vmatpush1.msra.mxu0 0.0
        %447 = vmatprep.mubr.f32.mxu0 0.0
        %448 = vmatmul.mubr.f32.gmra.mrb[0].mxu0 %v296
        %v449 = vpop.f32.mrb[0].mxu0
        %v450 = vadd.f32 %v366, %v449
        %v451 = vpop.f32.mrb[0].mxu0
        %v452 = vadd.f32 %v370, %v451
        %453 = vdwg.mxu0
        %454 = vmatprep.subr.mxu0 %v300
        %455 = vmatpush1.msra.mxu0 %v299
        %456 = vmatprep.subr.mxu0 %v304
        %457 = vmatpush1.msra.mxu0 %v303
        %458 = vmatprep.subr.mxu0 %v308
        %459 = vmatpush1.msra.mxu0 %v307
        %460 = vmatprep.subr.mxu0 %v312
        %461 = vmatpush1.msra.mxu0 %v311
        %462 = vmatprep.subr.mxu0 %v316
        %463 = vmatpush1.msra.mxu0 %v315
        %464 = vmatprep.subr.mxu0 %v320
        %465 = vmatpush1.msra.mxu0 %v319
        %466 = vmatprep.subr.mxu0 %v324
        %467 = vmatpush1.msra.mxu0 %v323
        %468 = vmatprep.subr.mxu0 %v328
        %469 = vmatpush1.msra.mxu0 %v327
        %470 = vmatprep.subr.mxu0 %v332
        %471 = vmatpush1.msra.mxu0 %v331
        %472 = vmatprep.subr.mxu0 %v336
        %473 = vmatpush1.msra.mxu0 %v335
        %474 = vmatprep.subr.mxu0 %v340
        %475 = vmatpush1.msra.mxu0 %v339
        %476 = vmatprep.subr.mxu0 %v344
        %477 = vmatpush1.msra.mxu0 %v343
        %478 = vmatprep.subr.mxu0 %v348
        %479 = vmatpush1.msra.mxu0 %v347
        %480 = vmatprep.subr.mxu0 %v352
        %481 = vmatpush1.msra.mxu0 %v351
        %482 = vmatprep.subr.mxu0 %v356
        %483 = vmatpush1.msra.mxu0 %v355
        %484 = vmatprep.subr.mxu0 %v360
        %485 = vmatpush1.msra.mxu0 %v359
        %486 = vmatprep.subr.mxu0 0.0
        %487 = vmatpush1.msra.mxu0 0.0
        %488 = vmatprep.subr.mxu0 0.0
        %489 = vmatpush1.msra.mxu0 0.0
        %490 = vmatprep.subr.mxu0 0.0
        %491 = vmatpush1.msra.mxu0 0.0
        %492 = vmatprep.subr.mxu0 0.0
        %493 = vmatpush1.msra.mxu0 0.0
        %494 = vmatprep.subr.mxu0 0.0
        %495 = vmatpush1.msra.mxu0 0.0
        %496 = vmatprep.subr.mxu0 0.0
        %497 = vmatpush1.msra.mxu0 0.0
        %498 = vmatprep.subr.mxu0 0.0
        %499 = vmatpush1.msra.mxu0 0.0
        %500 = vmatprep.subr.mxu0 0.0
        %501 = vmatpush1.msra.mxu0 0.0
        %502 = vmatprep.subr.mxu0 0.0
        %503 = vmatpush1.msra.mxu0 0.0
        %504 = vmatprep.subr.mxu0 0.0
        %505 = vmatpush1.msra.mxu0 0.0
        %506 = vmatprep.subr.mxu0 0.0
        %507 = vmatpush1.msra.mxu0 0.0
        %508 = vmatprep.subr.mxu0 0.0
        %509 = vmatpush1.msra.mxu0 0.0
        %510 = vmatprep.subr.mxu0 0.0
        %511 = vmatpush1.msra.mxu0 0.0
        %512 = vmatprep.subr.mxu0 0.0
        %513 = vmatpush1.msra.mxu0 0.0
        %514 = vmatprep.subr.mxu0 0.0
        %515 = vmatpush1.msra.mxu0 0.0
        %516 = vmatprep.subr.mxu0 0.0
        %517 = vmatpush1.msra.mxu0 0.0
        %518 = vmatprep.mubr.f32.mxu0 0.0
        %519 = vmatmul.mubr.f32.gmra.mrb[0].mxu0 %v296
        %v520 = vpop.f32.mrb[0].mxu0
        %v521 = vadd.f32 %v374, %v520
        %v522 = vpop.f32.mrb[0].mxu0
        %v523 = vadd.f32 %v378, %v522
        %524 = vdwg.mxu0
        %v525 = vmax.f32 %v450, %v452
        %v526 = vmax.f32 %v521, %v523
        %v527 = vmax.f32 %v525, %v526
        %528 = vmax.xlane.f32.xlu0 %v527
        %v529 = vpop.xlane.xlu0 %528
        %vm530 = vcmp.ge.f32.partialorder %v450, %v529
        %vm531 = vcmp.ge.f32.partialorder %v452, %v529
        %vm532 = vcmp.ge.f32.partialorder %v521, %v529
        %vm533 = vcmp.ge.f32.partialorder %v523, %v529
        %v534 = vsel %vm530, -inf, %v450
        %v535 = vsel %vm531, -inf, %v452
        %v536 = vsel %vm532, -inf, %v521
        %v537 = vsel %vm533, -inf, %v523
        %v538 = vmax.f32 %v534, %v535
        %v539 = vmax.f32 %v536, %v537
        %v540 = vmax.f32 %v538, %v539
        %541 = vmax.xlane.f32.xlu0 %v540
        %v542 = vpop.xlane.xlu0 %541
        %vm543 = vcmp.ge.f32.partialorder %v534, %v542
        %vm544 = vcmp.ge.f32.partialorder %v535, %v542
        %vm545 = vcmp.ge.f32.partialorder %v536, %v542
        %vm546 = vcmp.ge.f32.partialorder %v537, %v542
        %v547 = vsel %vm543, -inf, %v534
        %v548 = vsel %vm544, -inf, %v535
        %v549 = vsel %vm545, -inf, %v536
        %v550 = vsel %vm546, -inf, %v537
        %v551 = vmax.f32 %v547, %v548
        %v552 = vmax.f32 %v549, %v550
        %v553 = vmax.f32 %v551, %v552
        %554 = vmax.xlane.f32.xlu0 %v553
        %v555 = vpop.xlane.xlu0 %554
        %vm556 = vcmp.ge.f32.partialorder %v547, %v555
        %vm557 = vcmp.ge.f32.partialorder %v548, %v555
        %vm558 = vcmp.ge.f32.partialorder %v549, %v555
        %vm559 = vcmp.ge.f32.partialorder %v550, %v555
        %v560 = vsel %vm556, -inf, %v547
        %v561 = vsel %vm557, -inf, %v548
        %v562 = vsel %vm558, -inf, %v549
        %v563 = vsel %vm559, -inf, %v550
        %v564 = vmax.f32 %v560, %v561
        %v565 = vmax.f32 %v562, %v563
        %v566 = vmax.f32 %v564, %v565
        %567 = vmax.xlane.f32.xlu0 %v566
        %v568 = vpop.xlane.xlu0 %567
        %vm569 = vcmp.ge.f32.partialorder %v560, %v568
        %vm570 = vcmp.ge.f32.partialorder %v561, %v568
        %vm571 = vcmp.ge.f32.partialorder %v562, %v568
        %vm572 = vcmp.ge.f32.partialorder %v563, %v568
        %v573 = vsel %vm569, -inf, %v560
        %v574 = vsel %vm570, -inf, %v561
        %v575 = vsel %vm571, -inf, %v562
        %v576 = vsel %vm572, -inf, %v563
        %v577 = vmax.f32 %v573, %v574
        %v578 = vmax.f32 %v575, %v576
        %v579 = vmax.f32 %v577, %v578
        %580 = vmax.xlane.f32.xlu0 %v579
        %v581 = vpop.xlane.xlu0 %580
        %vm582 = vcmp.ge.f32.partialorder %v573, %v581
        %vm583 = vcmp.ge.f32.partialorder %v574, %v581
        %vm584 = vcmp.ge.f32.partialorder %v575, %v581
        %vm585 = vcmp.ge.f32.partialorder %v576, %v581
        %v586 = vsel %vm582, -inf, %v573
        %v587 = vsel %vm583, -inf, %v574
        %v588 = vsel %vm584, -inf, %v575
        %v589 = vsel %vm585, -inf, %v576
        %v590 = vmax.f32 %v586, %v587
        %v591 = vmax.f32 %v588, %v589
        %v592 = vmax.f32 %v590, %v591
        %593 = vmax.xlane.f32.xlu0 %v592
        %v594 = vpop.xlane.xlu0 %593
        %vm595 = vcmp.ge.f32.partialorder %v586, %v594
        %vm596 = vcmp.ge.f32.partialorder %v587, %v594
        %vm597 = vcmp.ge.f32.partialorder %v588, %v594
        %vm598 = vcmp.ge.f32.partialorder %v589, %v594
        %v599 = vsel %vm595, -inf, %v586
        %v600 = vsel %vm596, -inf, %v587
        %v601 = vsel %vm597, -inf, %v588
        %v602 = vsel %vm598, -inf, %v589
        %v603 = vmax.f32 %v599, %v600
        %v604 = vmax.f32 %v601, %v602
        %v605 = vmax.f32 %v603, %v604
        %606 = vmax.xlane.f32.xlu0 %v605
        %v607 = vpop.xlane.xlu0 %606
        %vm608 = vcmp.ge.f32.partialorder %v599, %v607
        %vm609 = vcmp.ge.f32.partialorder %v600, %v607
        %vm610 = vcmp.ge.f32.partialorder %v601, %v607
        %vm611 = vcmp.ge.f32.partialorder %v602, %v607
        %v612 = vsel %vm608, -inf, %v599
        %v613 = vsel %vm609, -inf, %v600
        %v614 = vsel %vm610, -inf, %v601
        %v615 = vsel %vm611, -inf, %v602
        %v616 = vmax.f32 %v612, %v613
        %v617 = vmax.f32 %v614, %v615
        %v618 = vmax.f32 %v616, %v617
        %619 = vmax.xlane.f32.xlu0 %v618
        %v620 = vpop.xlane.xlu0 %619
        %vm621 = vcmp.ge.f32.partialorder %v612, %v620
        %vm622 = vcmp.ge.f32.partialorder %v613, %v620
        %vm623 = vcmp.ge.f32.partialorder %v614, %v620
        %vm624 = vcmp.ge.f32.partialorder %v615, %v620
        %v625 = vsel %vm621, -inf, %v612
        %v626 = vsel %vm622, -inf, %v613
        %v627 = vsel %vm623, -inf, %v614
        %v628 = vsel %vm624, -inf, %v615
        %v629 = vmax.f32 %v625, %v626
        %v630 = vmax.f32 %v627, %v628
        %v631 = vmax.f32 %v629, %v630
        %632 = vmax.xlane.f32.xlu0 %v631
        %v633 = vpop.xlane.xlu0 %632
        %vm634 = vcmp.ge.f32.partialorder %v625, %v633
        %vm635 = vcmp.ge.f32.partialorder %v626, %v633
        %vm636 = vcmp.ge.f32.partialorder %v627, %v633
        %vm637 = vcmp.ge.f32.partialorder %v628, %v633
        %v638 = vsel %vm634, -inf, %v625
        %v639 = vsel %vm635, -inf, %v626
        %v640 = vsel %vm636, -inf, %v627
        %v641 = vsel %vm637, -inf, %v628
        %v642 = vmax.f32 %v638, %v639
        %v643 = vmax.f32 %v640, %v641
        %v644 = vmax.f32 %v642, %v643
        %645 = vmax.xlane.f32.xlu0 %v644
        %v646 = vpop.xlane.xlu0 %645
        %vm647 = vcmp.ge.f32.partialorder %v638, %v646
        %vm648 = vcmp.ge.f32.partialorder %v639, %v646
        %vm649 = vcmp.ge.f32.partialorder %v640, %v646
        %vm650 = vcmp.ge.f32.partialorder %v641, %v646
        %v651 = vsel %vm647, -inf, %v638
        %v652 = vsel %vm648, -inf, %v639
        %v653 = vsel %vm649, -inf, %v640
        %v654 = vsel %vm650, -inf, %v641
        %v655 = vmax.f32 %v651, %v652
        %v656 = vmax.f32 %v653, %v654
        %v657 = vmax.f32 %v655, %v656
        %658 = vmax.xlane.f32.xlu0 %v657
        %v659 = vpop.xlane.xlu0 %658
        %vm660 = vcmp.ge.f32.partialorder %v651, %v659
        %vm661 = vcmp.ge.f32.partialorder %v652, %v659
        %vm662 = vcmp.ge.f32.partialorder %v653, %v659
        %vm663 = vcmp.ge.f32.partialorder %v654, %v659
        %v664 = vsel %vm660, -inf, %v651
        %v665 = vsel %vm661, -inf, %v652
        %v666 = vsel %vm662, -inf, %v653
        %v667 = vsel %vm663, -inf, %v654
        %v668 = vmax.f32 %v664, %v665
        %v669 = vmax.f32 %v666, %v667
        %v670 = vmax.f32 %v668, %v669
        %671 = vmax.xlane.f32.xlu0 %v670
        %v672 = vpop.xlane.xlu0 %671
        %vm673 = vcmp.ge.f32.partialorder %v664, %v672
        %vm674 = vcmp.ge.f32.partialorder %v665, %v672
        %vm675 = vcmp.ge.f32.partialorder %v666, %v672
        %vm676 = vcmp.ge.f32.partialorder %v667, %v672
        %v677 = vsel %vm673, -inf, %v664
        %v678 = vsel %vm674, -inf, %v665
        %v679 = vsel %vm675, -inf, %v666
        %v680 = vsel %vm676, -inf, %v667
        %v681 = vmax.f32 %v677, %v678
        %v682 = vmax.f32 %v679, %v680
        %v683 = vmax.f32 %v681, %v682
        %684 = vmax.xlane.f32.xlu0 %v683
        %v685 = vpop.xlane.xlu0 %684
        %vm686 = vcmp.ge.f32.partialorder %v677, %v685
        %vm687 = vcmp.ge.f32.partialorder %v678, %v685
        %vm688 = vcmp.ge.f32.partialorder %v679, %v685
        %vm689 = vcmp.ge.f32.partialorder %v680, %v685
        %v690 = vsel %vm686, -inf, %v677
        %v691 = vsel %vm687, -inf, %v678
        %v692 = vsel %vm688, -inf, %v679
        %v693 = vsel %vm689, -inf, %v680
        %v694 = vmax.f32 %v690, %v691
        %v695 = vmax.f32 %v692, %v693
        %v696 = vmax.f32 %v694, %v695
        %697 = vmax.xlane.f32.xlu0 %v696
        %v698 = vpop.xlane.xlu0 %697
        %vm699 = vcmp.ge.f32.partialorder %v690, %v698
        %vm700 = vcmp.ge.f32.partialorder %v691, %v698
        %vm701 = vcmp.ge.f32.partialorder %v692, %v698
        %vm702 = vcmp.ge.f32.partialorder %v693, %v698
        %v703 = vsel %vm699, -inf, %v690
        %v704 = vsel %vm700, -inf, %v691
        %v705 = vsel %vm701, -inf, %v692
        %v706 = vsel %vm702, -inf, %v693
        %v707 = vmax.f32 %v703, %v704
        %v708 = vmax.f32 %v705, %v706
        %v709 = vmax.f32 %v707, %v708
        %710 = vmax.xlane.f32.xlu0 %v709
        %v711 = vpop.xlane.xlu0 %710
        %vm712 = vcmp.ge.f32.partialorder %v703, %v711
        %vm713 = vcmp.ge.f32.partialorder %v704, %v711
        %vm714 = vcmp.ge.f32.partialorder %v705, %v711
        %vm715 = vcmp.ge.f32.partialorder %v706, %v711
        %v716 = vsel %vm712, -inf, %v703
        %v717 = vsel %vm713, -inf, %v704
        %v718 = vsel %vm714, -inf, %v705
        %v719 = vsel %vm715, -inf, %v706
        %v720 = vmax.f32 %v716, %v717
        %v721 = vmax.f32 %v718, %v719
        %v722 = vmax.f32 %v720, %v721
        %723 = vmax.xlane.f32.xlu0 %v722
        %v724 = vpop.xlane.xlu0 %723
        %v725 = vmax.f32 %v724, 0.0
        %vm726 = vcmp.ge.f32.partialorder %v450, %v725
        %vm727 = vcmp.ge.f32.partialorder %v452, %v725
        %vm728 = vcmp.ge.f32.partialorder %v521, %v725
        %vm729 = vcmp.ge.f32.partialorder %v523, %v725
        %v730 = vsel %vm726, %v450, 0.0
        %v731 = vsel %vm727, %v452, 0.0
        %v732 = vsel %vm728, %v521, 0.0
        %v733 = vsel %vm729, %v523, 0.0
        %v734 = vld [vmem:[#allocation7] sm:$0xff]
        %v735 = vld [vmem:[#allocation7 + $0x8] sm:$0xff]
        %v736 = vld [vmem:[#allocation7 + $0x10] sm:$0xff]
        %v737 = vld [vmem:[#allocation7 + $0x18] sm:$0xff]
        %v738 = vld [vmem:[#allocation7 + $0x20] sm:$0xff]
        %v739 = vld [vmem:[#allocation7 + $0x28] sm:$0xff]
        %v740 = vld [vmem:[#allocation7 + $0x30] sm:$0xff]
        %v741 = vld [vmem:[#allocation7 + $0x38] sm:$0xff]
        %v742 = vld [vmem:[#allocation7 + $0x40] sm:$0xff]
        %v743 = vld [vmem:[#allocation7 + $0x48] sm:$0xff]
        %v744 = vld [vmem:[#allocation7 + $0x50] sm:$0xff]
        %v745 = vld [vmem:[#allocation7 + $0x58] sm:$0xff]
        %v746 = vld [vmem:[#allocation7 + $0x60] sm:$0xff]
        %v747 = vld [vmem:[#allocation7 + $0x68] sm:$0xff]
        %v748 = vld [vmem:[#allocation7 + $0x70] sm:$0xff]
        %v749 = vld [vmem:[#allocation7 + $0x78] sm:$0xff]
        %v750 = vld [vmem:[#allocation7 + $0x80] sm:$0xff]
        %v751 = vld [vmem:[#allocation7 + $0x88] sm:$0xff]
        %v752 = vld [vmem:[#allocation7 + $0x90] sm:$0xff]
        %v753 = vld [vmem:[#allocation7 + $0x98] sm:$0xff]
        %v754 = vld [vmem:[#allocation7 + $0xa0] sm:$0xff]
        %v755 = vld [vmem:[#allocation7 + $0xa8] sm:$0xff]
        %v756 = vld [vmem:[#allocation7 + $0xb0] sm:$0xff]
        %v757 = vld [vmem:[#allocation7 + $0xb8] sm:$0xff]
        %v758 = vld [vmem:[#allocation7 + $0xc0] sm:$0xff]
        %v759 = vld [vmem:[#allocation7 + $0xc8] sm:$0xff]
        %v760 = vld [vmem:[#allocation7 + $0xd0] sm:$0xff]
        %v761 = vld [vmem:[#allocation7 + $0xd8] sm:$0xff]
        %v762 = vld [vmem:[#allocation7 + $0xe0] sm:$0xff]
        %v763 = vld [vmem:[#allocation7 + $0xe8] sm:$0xff]
        %v764 = vld [vmem:[#allocation7 + $0xf0] sm:$0xff]
        %v765 = vld [vmem:[#allocation7 + $0xf8] sm:$0xff]
        %v766 = vld [vmem:[#allocation7 + $0x100] sm:$0xff]
        %v767 = vld [vmem:[#allocation7 + $0x108] sm:$0xff]
        %v768 = vld [vmem:[#allocation7 + $0x110] sm:$0xff]
        %v769 = vld [vmem:[#allocation7 + $0x118] sm:$0xff]
        %v770 = vld [vmem:[#allocation7 + $0x120] sm:$0xff]
        %v771 = vld [vmem:[#allocation7 + $0x128] sm:$0xff]
        %v772 = vld [vmem:[#allocation7 + $0x130] sm:$0xff]
        %v773 = vld [vmem:[#allocation7 + $0x138] sm:$0xff]
        %v774 = vld [vmem:[#allocation7 + $0x140] sm:$0xff]
        %v775 = vld [vmem:[#allocation7 + $0x148] sm:$0xff]
        %v776 = vld [vmem:[#allocation7 + $0x150] sm:$0xff]
        %v777 = vld [vmem:[#allocation7 + $0x158] sm:$0xff]
        %v778 = vld [vmem:[#allocation7 + $0x160] sm:$0xff]
        %v779 = vld [vmem:[#allocation7 + $0x168] sm:$0xff]
        %v780 = vld [vmem:[#allocation7 + $0x170] sm:$0xff]
        %v781 = vld [vmem:[#allocation7 + $0x178] sm:$0xff]
        %v782 = vld [vmem:[#allocation7 + $0x180] sm:$0xff]
        %v783 = vld [vmem:[#allocation7 + $0x188] sm:$0xff]
        %v784 = vld [vmem:[#allocation7 + $0x190] sm:$0xff]
        %v785 = vld [vmem:[#allocation7 + $0x198] sm:$0xff]
        %v786 = vld [vmem:[#allocation7 + $0x1a0] sm:$0xff]
        %v787 = vld [vmem:[#allocation7 + $0x1a8] sm:$0xff]
        %v788 = vld [vmem:[#allocation7 + $0x1b0] sm:$0xff]
        %v789 = vld [vmem:[#allocation7 + $0x1b8] sm:$0xff]
        %v790 = vld [vmem:[#allocation7 + $0x1c0] sm:$0xff]
        %v791 = vld [vmem:[#allocation7 + $0x1c8] sm:$0xff]
        %v792 = vld [vmem:[#allocation7 + $0x1d0] sm:$0xff]
        %v793 = vld [vmem:[#allocation7 + $0x1d8] sm:$0xff]
        %v794 = vld [vmem:[#allocation7 + $0x1e0] sm:$0xff]
        %v795 = vld [vmem:[#allocation7 + $0x1e8] sm:$0xff]
        %v796 = vld [vmem:[#allocation7 + $0x1f0] sm:$0xff]
        %v797 = vld [vmem:[#allocation7 + $0x1f8] sm:$0xff]
        %798 = vmatprep.subr.mxu0 0.0
        %799 = vmatpush1.msra.mxu0 %v734
        %800 = vmatprep.subr.mxu0 0.0
        %801 = vmatpush1.msra.mxu0 %v735
        %802 = vmatprep.subr.mxu0 0.0
        %803 = vmatpush1.msra.mxu0 %v736
        %804 = vmatprep.subr.mxu0 0.0
        %805 = vmatpush1.msra.mxu0 %v737
        %806 = vmatprep.subr.mxu0 0.0
        %807 = vmatpush1.msra.mxu0 %v738
        %808 = vmatprep.subr.mxu0 0.0
        %809 = vmatpush1.msra.mxu0 %v739
        %810 = vmatprep.subr.mxu0 0.0
        %811 = vmatpush1.msra.mxu0 %v740
        %812 = vmatprep.subr.mxu0 0.0
        %813 = vmatpush1.msra.mxu0 %v741
        %814 = vmatprep.subr.mxu0 0.0
        %815 = vmatpush1.msra.mxu0 %v742
        %816 = vmatprep.subr.mxu0 0.0
        %817 = vmatpush1.msra.mxu0 %v743
        %818 = vmatprep.subr.mxu0 0.0
        %819 = vmatpush1.msra.mxu0 %v744
        %820 = vmatprep.subr.mxu0 0.0
        %821 = vmatpush1.msra.mxu0 %v745
        %822 = vmatprep.subr.mxu0 0.0
        %823 = vmatpush1.msra.mxu0 %v746
        %824 = vmatprep.subr.mxu0 0.0
        %825 = vmatpush1.msra.mxu0 %v747
        %826 = vmatprep.subr.mxu0 0.0
        %827 = vmatpush1.msra.mxu0 %v748
        %828 = vmatprep.subr.mxu0 0.0
        %829 = vmatpush1.msra.mxu0 %v749
        %830 = vmatprep.subr.mxu0 0.0
        %831 = vmatpush1.msra.mxu0 %v750
        %832 = vmatprep.subr.mxu0 0.0
        %833 = vmatpush1.msra.mxu0 %v751
        %834 = vmatprep.subr.mxu0 0.0
        %835 = vmatpush1.msra.mxu0 %v752
        %836 = vmatprep.subr.mxu0 0.0
        %837 = vmatpush1.msra.mxu0 %v753
        %838 = vmatprep.subr.mxu0 0.0
        %839 = vmatpush1.msra.mxu0 %v754
        %840 = vmatprep.subr.mxu0 0.0
        %841 = vmatpush1.msra.mxu0 %v755
        %842 = vmatprep.subr.mxu0 0.0
        %843 = vmatpush1.msra.mxu0 %v756
        %844 = vmatprep.subr.mxu0 0.0
        %845 = vmatpush1.msra.mxu0 %v757
        %846 = vmatprep.subr.mxu0 0.0
        %847 = vmatpush1.msra.mxu0 %v758
        %848 = vmatprep.subr.mxu0 0.0
        %849 = vmatpush1.msra.mxu0 %v759
        %850 = vmatprep.subr.mxu0 0.0
        %851 = vmatpush1.msra.mxu0 %v760
        %852 = vmatprep.subr.mxu0 0.0
        %853 = vmatpush1.msra.mxu0 %v761
        %854 = vmatprep.subr.mxu0 0.0
        %855 = vmatpush1.msra.mxu0 %v762
        %856 = vmatprep.subr.mxu0 0.0
        %857 = vmatpush1.msra.mxu0 %v763
        %858 = vmatprep.subr.mxu0 0.0
        %859 = vmatpush1.msra.mxu0 %v764
        %860 = vmatprep.subr.mxu0 0.0
        %861 = vmatpush1.msra.mxu0 %v765
        %862 = vmatprep.mubr.f32.mxu0 %v731
        %863 = vmatmul.mubr.f32.gmra.mrb[0].mxu0 %v730
        %v864 = vpop.f32.mrb[0].mxu0
        %v865 = vadd.f32 %v294, %v864
        %v866 = vpop.f32.mrb[0].mxu0
        %867 = vdwg.mxu0
        %868 = vmatprep.subr.mxu0 0.0
        %869 = vmatpush1.msra.mxu0 %v766
        %870 = vmatprep.subr.mxu0 0.0
        %871 = vmatpush1.msra.mxu0 %v767
        %872 = vmatprep.subr.mxu0 0.0
        %873 = vmatpush1.msra.mxu0 %v768
        %874 = vmatprep.subr.mxu0 0.0
        %875 = vmatpush1.msra.mxu0 %v769
        %876 = vmatprep.subr.mxu0 0.0
        %877 = vmatpush1.msra.mxu0 %v770
        %878 = vmatprep.subr.mxu0 0.0
        %879 = vmatpush1.msra.mxu0 %v771
        %880 = vmatprep.subr.mxu0 0.0
        %881 = vmatpush1.msra.mxu0 %v772
        %882 = vmatprep.subr.mxu0 0.0
        %883 = vmatpush1.msra.mxu0 %v773
        %884 = vmatprep.subr.mxu0 0.0
        %885 = vmatpush1.msra.mxu0 %v774
        %886 = vmatprep.subr.mxu0 0.0
        %887 = vmatpush1.msra.mxu0 %v775
        %888 = vmatprep.subr.mxu0 0.0
        %889 = vmatpush1.msra.mxu0 %v776
        %890 = vmatprep.subr.mxu0 0.0
        %891 = vmatpush1.msra.mxu0 %v777
        %892 = vmatprep.subr.mxu0 0.0
        %893 = vmatpush1.msra.mxu0 %v778
        %894 = vmatprep.subr.mxu0 0.0
        %895 = vmatpush1.msra.mxu0 %v779
        %896 = vmatprep.subr.mxu0 0.0
        %897 = vmatpush1.msra.mxu0 %v780
        %898 = vmatprep.subr.mxu0 0.0
        %899 = vmatpush1.msra.mxu0 %v781
        %900 = vmatprep.subr.mxu0 0.0
        %901 = vmatpush1.msra.mxu0 %v782
        %902 = vmatprep.subr.mxu0 0.0
        %903 = vmatpush1.msra.mxu0 %v783
        %904 = vmatprep.subr.mxu0 0.0
        %905 = vmatpush1.msra.mxu0 %v784
        %906 = vmatprep.subr.mxu0 0.0
        %907 = vmatpush1.msra.mxu0 %v785
        %908 = vmatprep.subr.mxu0 0.0
        %909 = vmatpush1.msra.mxu0 %v786
        %910 = vmatprep.subr.mxu0 0.0
        %911 = vmatpush1.msra.mxu0 %v787
        %912 = vmatprep.subr.mxu0 0.0
        %913 = vmatpush1.msra.mxu0 %v788
        %914 = vmatprep.subr.mxu0 0.0
        %915 = vmatpush1.msra.mxu0 %v789
        %916 = vmatprep.subr.mxu0 0.0
        %917 = vmatpush1.msra.mxu0 %v790
        %918 = vmatprep.subr.mxu0 0.0
        %919 = vmatpush1.msra.mxu0 %v791
        %920 = vmatprep.subr.mxu0 0.0
        %921 = vmatpush1.msra.mxu0 %v792
        %922 = vmatprep.subr.mxu0 0.0
        %923 = vmatpush1.msra.mxu0 %v793
        %924 = vmatprep.subr.mxu0 0.0
        %925 = vmatpush1.msra.mxu0 %v794
        %926 = vmatprep.subr.mxu0 0.0
        %927 = vmatpush1.msra.mxu0 %v795
        %928 = vmatprep.subr.mxu0 0.0
        %929 = vmatpush1.msra.mxu0 %v796
        %930 = vmatprep.subr.mxu0 0.0
        %931 = vmatpush1.msra.mxu0 %v797
        %932 = vmatprep.mubr.f32.mxu0 %v733
        %933 = vmatmul.mubr.f32.gmra.mrb[0].mxu0 %v732
        %v934 = vpop.f32.mrb[0].mxu0
        %v935 = vadd.f32 %v865, %v934
        %v936 = vpop.f32.mrb[0].mxu0
        %937 = vdwg.mxu0
        %v938 = vmul.f32 %v935, %v285
        %v939 = vadd.f32 %v938, %v273
        %940 = vst [vmem:[%s268] sm:$0xff] %v939
        %s941 = sand.u32 %s141, 1
        %s942 = scalar_lea.sflag [#allocation4], %s941
        %s943 = sand.u32 %s141, 1
        %s944 = smul.addr %s943, 8
        %s945 = scalar_lea.vmem [#allocation8], %s944
        // Predicated region
        $region53: #{tpu_custom_call.1} parent=39 // pred_check
          %p946 = pneg %p151
        $region54: #{tpu_custom_call.1} parent=39 // pred_check_branch
          %948 = sbr.rel (%p946) target = $region56
        $region55: #{tpu_custom_call.1} parent=39 // pred_region
          %s950 = ssub.s32 128, 128
          %951 = vsyncadd %s942, %s950
          %s952 = smul.addr %s23, 128
          %s953 = scalar_lea.hbm %s5, %s952
          %s955 = sshll.u32 %s945, 4
          %s956 = int_to_ptr.vmem [resolvable:$true] %s955
          %958 = dma.vmem_to_hbm [thread:$0]  %s956, 128, %s953, %s942
        $region56: #{tpu_custom_call.1} parent=39 // pred_fallthru
          _
      $region40: #{tpu_custom_call.1} parent=5 // pred_fallthru
        _
      %p959 = scmp.le.s32.totalorder 2, %s18
      // Predicated region
      $region57: #{tpu_custom_call.1} parent=5 // pred_check
        %p960 = pneg %p959
      $region58: #{tpu_custom_call.1} parent=5 // pred_check_branch
        %962 = sbr.rel (%p960) target = $region60
      $region59: #{tpu_custom_call.1} parent=5 // pred_region
        %s963 = ssub.s32 %s18, 2
        // Predicated region
        $region61: #{tpu_custom_call.1} parent=59 // pred_check
          %p964 = pneg %p157
        $region62: #{tpu_custom_call.1} parent=59 // pred_check_branch
          %966 = sbr.rel (%p964) target = $region64
        $region63: #{tpu_custom_call.1} parent=59 // pred_region
          %s967 = sand.u32 %s142, 1
          %s968 = scalar_lea.sflag [#allocation4], %s967
          %s969 = sand.u32 %s142, 1
          %s970 = smul.addr %s969, 8
          %s971 = scalar_lea.vmem [#allocation8], %s970
          %972 = dma.done %s968, 128
        $region64: #{tpu_custom_call.1} parent=59 // pred_fallthru
          _
      $region60: #{tpu_custom_call.1} parent=5 // pred_fallthru
        _
    $region6: #{tpu_custom_call.1} parent=1 // loop_footer
      %s22 = sadd.s32 1, %s18
    $region7: #{tpu_custom_call.1} parent=1 // loop_footer_branch
      %17 = sbr.rel target = $region3
    $region8: #{tpu_custom_call.1} parent=1 // loop_exit
      _
    %973 = vsyncpa [#allocation3], 1
    %s974 = scalar_lea.sflag [#allocation3], 1
    %975 = vsyncpa %s974, 1
    %976 = vsyncpa [#allocation6], 1
    %977 = vsyncpa [#allocation4], 1
    %s978 = scalar_lea.sflag [#allocation4], 1
    %979 = vsyncpa %s978, 1

</llo_original>
